<compile_context>
chip_gen: v6e
topology: v6e:2x2x1
jax: 0.10.0
libtpu: 0.0.40
codegen_flags: <defaults>
</compile_context>

<pallas_src>
import jax
import jax.numpy as jnp
from jax.experimental import pallas as pl
from jax.experimental.pallas import tpu as pltpu

# ---- configuration (mirrors CopyRnnDecoder.__init__ args, small shapes) ----
B = 2              # batch
L = 8              # max_src_len
E = 16             # embed_dim
SRC_H = 16         # src_hidden_size (bidirectional=False)
SED = SRC_H + E    # encoder feature dim = src_hidden + embed = 32
TH = 32            # target_hidden_size
V = 64             # vocab_size
OOV = 8            # max_oov_count
TV = V + OOV       # total vocab size
UNK_ID = 1
PAD_ID = 0

# ---- packed int-input lane layout (one (B,128) int32 array) ----
COL_OOV = 0                  # [0:L]      src_tokens_with_oov
COL_PAD = L                  # [L:2L]     encoder padding mask (1 = pad)
COL_TOK = 2 * L              # [2L]       prev output token id (un-clamped)

# ---- packed weight-slab layout: (R_SLAB, 384) f32, built ONCE in prepack ----
SLAB_W = 384                 # 3 x 128-lane gate groups
G_R, G_Z, G_N = 0, 128, 256  # r | z | n gate lane-group offsets
R_EWIH = 0                   # (V, 3*TH)   embedding @ W_ih^T, gate-split
R_WHH = 64                   # (TH, 3*TH)  W_hh^T, gate-split
R_BIH = 96                   # 1 row, gate-split
R_BHH = 104                  # 1 row, gate-split
R_WATTN = 112                # (TH, SED)   cols 0:SED
R_WOP_CTX = 144              # (SED, TH)   cols 0:TH  (output_proj, context rows)
R_WOP_H = 176                # (TH, TH)    cols 0:TH  (output_proj, h rows)
R_BOP = 208                  # 1 row, cols 0:TH
R_WGEN = 216                 # (TH, V)     cols 0:V (cols V:TV stay zero)
R_WCP = 248                  # (SED, TH)   cols 0:TH
R_SLAB = 280                 # multiple of 8 sublanes

# ---- packed output-slab lane layout ----
OUT_W = 256                  # lane-dense (multiple of 128)
O_PROB = 0                   # [0:TV]          log total prob
O_ATTN = 128                 # [128:128+TH]    attn_output
O_H = 128 + TH               # [160:160+TH]    new rnn state


# ----------------------------- Pallas kernel ------------------------------- #
def copy_rnn_decoder_kernel(ints_ref, flt_ref, enc_ref, w_ref, out_ref):
  f32 = jnp.float32
  ints = ints_ref[...]                      # (Bp, 128) int32
  Bp = ints.shape[0]
  src_oov = ints[:, COL_OOV:COL_OOV + L]    # (Bp, L)
  pad = ints[:, COL_PAD:COL_PAD + L]        # (Bp, L)  1 = padding
  tok = ints[:, COL_TOK:COL_TOK + 1]        # (Bp, 1)  prev token id
  h_prev = flt_ref[:, 0:TH]                 # (Bp, TH)
  enc = enc_ref[...]                        # (Bp, L, SED)

  # ---- embedding gather fused with GRU input projection (onehot @ Emb@Wih^T) --
  tok_unk = jnp.where(tok >= V, UNK_ID, tok)                             # UNK clamp
  iota_v = jax.lax.broadcasted_iota(jnp.int32, (Bp, V), 1)
  onehot = (tok_unk == iota_v).astype(f32)                               # (Bp, V)
  gi = jnp.dot(onehot, w_ref[R_EWIH:R_EWIH + V, :],
               preferred_element_type=f32) + w_ref[R_BIH:R_BIH + 1, :]   # (Bp,384)
  gh = jnp.dot(h_prev, w_ref[R_WHH:R_WHH + TH, :],
               preferred_element_type=f32) + w_ref[R_BHH:R_BHH + 1, :]   # (Bp,384)

  # ---- GRU cell, gates on 128-lane-aligned groups ----
  r = jax.nn.sigmoid(gi[:, G_R:G_R + TH] + gh[:, G_R:G_R + TH])
  z = jax.nn.sigmoid(gi[:, G_Z:G_Z + TH] + gh[:, G_Z:G_Z + TH])
  n = jnp.tanh(gi[:, G_N:G_N + TH] + r * gh[:, G_N:G_N + TH])
  h_new = (1.0 - z) * n + z * h_prev                                     # (Bp,TH)

  # ---- attention ("general" score) ----
  q = jnp.dot(h_new, w_ref[R_WATTN:R_WATTN + TH, :],
              preferred_element_type=f32)[:, :SED]                       # (Bp,SED)
  scores = jnp.sum(enc * q[:, None, :], axis=2)                          # (Bp,L)
  scores = jnp.where(pad > 0, -1e30, scores)   # -1e30 instead of -inf (no NaN)
  s_max = jnp.max(scores, axis=1, keepdims=True)
  s_e = jnp.exp(scores - s_max)
  attn_w = s_e * pl.reciprocal(jnp.sum(s_e, axis=1, keepdims=True),
                               approx=True)                              # (Bp,L)
  context = jnp.sum(attn_w[:, :, None] * enc, axis=1)                    # (Bp,SED)

  # output projection as two dots (no lane concat of [context, h_new])
  op = (jnp.dot(context, w_ref[R_WOP_CTX:R_WOP_CTX + SED, :],
                preferred_element_type=f32)
        + jnp.dot(h_new, w_ref[R_WOP_H:R_WOP_H + TH, :],
                  preferred_element_type=f32)
        + w_ref[R_BOP:R_BOP + 1, :])
  attn_out = jnp.tanh(op[:, :TH])                                        # (Bp,TH)

  # ---- generate logits (exp of projection) with iota-masked OOV filler ----
  gen_logit = jnp.dot(attn_out, w_ref[R_WGEN:R_WGEN + TH, :],
                      preferred_element_type=f32)[:, :TV]                # (Bp,TV)
  iota_tv1 = jax.lax.broadcasted_iota(jnp.int32, (Bp, TV), 1)
  gen_full = jnp.where(iota_tv1 < V, jnp.exp(gen_logit), 1e-10)          # (Bp,TV)

  # ---- copy score + scatter_add into vocab via masked select ----
  enc2 = enc.reshape(Bp * L, SED)
  cp = jnp.tanh(jnp.dot(enc2, w_ref[R_WCP:R_WCP + SED, :],
                        preferred_element_type=f32)[:, :TH])             # (Bp*L,TH)
  cp = cp.reshape(Bp, L, TH)
  cs = jnp.sum(cp * attn_out[:, None, :], axis=2)                        # (Bp,L)
  cs = jnp.where(pad > 0, 0.0, jnp.exp(cs))        # exp(-inf)=0 on padded slots
  iota_tv = jax.lax.broadcasted_iota(jnp.int32, (Bp, L, TV), 2)
  copy_vocab = jnp.sum(
      jnp.where(src_oov[:, :, None] == iota_tv, cs[:, :, None], 0.0),
      axis=1)                                                            # (Bp,TV)

  # ---- normalize in log space: log(total) - log(sum) (no approx recip here) --
  total = gen_full + copy_vocab                                          # (Bp,TV)
  logp = jnp.log(total) - jnp.log(jnp.sum(total, axis=1, keepdims=True))

  # ---- one lane-dense packed output store ----
  out_ref[...] = jnp.concatenate(
      [logp,                                    # [0:TV]
       jnp.zeros((Bp, 128 - TV), f32),          # pad to lane 128
       attn_out,                                # [128:160]
       h_new,                                   # [160:192]
       jnp.zeros((Bp, OUT_W - O_H - TH), f32)], # pad to 256
      axis=1)


# ------------------------------ prepack (once) ------------------------------ #
def prepack_params(params):
  """Build the lane-aligned weight slab ONCE at param-load time (not per step)."""
  slab = jnp.zeros((R_SLAB, SLAB_W), jnp.float32)

  def set_gates(s, row0, mat):          # mat: (rows, 3*TH) with r|z|n contiguous
    rows = mat.shape[0]
    s = s.at[row0:row0 + rows, G_R:G_R + TH].set(mat[:, 0:TH])
    s = s.at[row0:row0 + rows, G_Z:G_Z + TH].set(mat[:, TH:2 * TH])
    s = s.at[row0:row0 + rows, G_N:G_N + TH].set(mat[:, 2 * TH:3 * TH])
    return s

  # fold embedding into the GRU input projection (exact: eval dropout identity,
  # input_feeding=False so the embedding feeds nothing else)
  embwih = params['embedding'] @ params['w_ih'].T          # (V, 3*TH)
  slab = set_gates(slab, R_EWIH, embwih)
  slab = set_gates(slab, R_WHH, params['w_hh'].T)
  slab = set_gates(slab, R_BIH, params['b_ih'][None, :])
  slab = set_gates(slab, R_BHH, params['b_hh'][None, :])
  slab = slab.at[R_WATTN:R_WATTN + TH, 0:SED].set(params['w_attn'].T)
  w_op_t = params['w_op'].T                                # (SED+TH, TH)
  slab = slab.at[R_WOP_CTX:R_WOP_CTX + SED, 0:TH].set(w_op_t[0:SED])
  slab = slab.at[R_WOP_H:R_WOP_H + TH, 0:TH].set(w_op_t[SED:SED + TH])
  slab = slab.at[R_BOP, 0:TH].set(params['b_op'])
  slab = slab.at[R_WGEN:R_WGEN + TH, 0:V].set(params['w_gen'].T)
  slab = slab.at[R_WCP:R_WCP + SED, 0:TH].set(params['w_cp'].T)
  return slab


# ------------------------------ per-step wrapper ---------------------------- #
def copy_rnn_decoder_forward(prev_output_tokens, encoder_output,
                             encoder_padding_mask, prev_context_state,
                             prev_rnn_state, src_tokens_with_oov, weight_slab):
  """Returns (log_total_prob [B,TV], attn_output [B,TH], rnn_state [1,B,TH])."""
  del prev_context_state  # only feeds the dead copy_state branch; unused here
  Bq = prev_output_tokens.shape[0]
  Bp = max(8, ((Bq + 7) // 8) * 8)    # pad batch to full sublanes

  # packed int input (src_oov | pad | tok); padded rows fully masked
  ints = jnp.zeros((Bp, 128), jnp.int32)
  ints = ints.at[:, COL_PAD:COL_PAD + L].set(1)
  ints = ints.at[:Bq, COL_OOV:COL_OOV + L].set(src_tokens_with_oov.astype(jnp.int32))
  ints = ints.at[:Bq, COL_PAD:COL_PAD + L].set(encoder_padding_mask.astype(jnp.int32))
  ints = ints.at[:Bq, COL_TOK].set(prev_output_tokens[:, 0].astype(jnp.int32))

  # packed float input (previous GRU state), lane-padded to 128
  flt = jnp.zeros((Bp, 128), jnp.float32)
  flt = flt.at[:Bq, 0:TH].set(prev_rnn_state[0])

  enc = jnp.zeros((Bp, L, SED), jnp.float32).at[:Bq].set(encoder_output)

  inputs = [ints, flt, enc, weight_slab]

  def full_spec(arr):
    nd = arr.ndim
    return pl.BlockSpec(arr.shape, lambda i, nd=nd: (0,) * nd)

  out = pl.pallas_call(
      copy_rnn_decoder_kernel,
      grid=(1,),
      in_specs=[full_spec(a) for a in inputs],
      out_specs=pl.BlockSpec((Bp, OUT_W), lambda i: (0, 0)),
      out_shape=jax.ShapeDtypeStruct((Bp, OUT_W), jnp.float32),
      compiler_params=pltpu.CompilerParams(dimension_semantics=("arbitrary",)),
  )(*inputs)

  total_prob = out[:Bq, O_PROB:O_PROB + TV]       # (B, TV)
  attn_output = out[:Bq, O_ATTN:O_ATTN + TH]      # (B, TH)
  rnn_state = out[:Bq, O_H:O_H + TH][None]        # (1, B, TH)
  return total_prob, attn_output, rnn_state


# --------------------------- pure-JAX reference ----------------------------- #
def ref_forward(prev_tokens, enc, pad_mask, prev_ctx, prev_rnn_state,
                src_oov, P):
  del prev_ctx  # only used by the input_feeding copy_state branch (unused)
  Bq = prev_tokens.shape[0]

  tok = jnp.where(prev_tokens >= V, UNK_ID, prev_tokens)
  x = P['embedding'][tok[:, 0]]                                        # (B,E)
  h = prev_rnn_state[0]
  gi = x @ P['w_ih'].T + P['b_ih']
  gh = h @ P['w_hh'].T + P['b_hh']
  ir, iz, inn = jnp.split(gi, 3, axis=1)
  hr, hz, hn = jnp.split(gh, 3, axis=1)
  r = jax.nn.sigmoid(ir + hr)
  z = jax.nn.sigmoid(iz + hz)
  n = jnp.tanh(inn + r * hn)
  h_new = (1.0 - z) * n + z * h
  rnn_output = h_new[:, None, :]
  rnn_state = h_new[None]

  q = jnp.einsum('bqt,st->bqs', rnn_output, P['w_attn'])
  aw = jnp.einsum('bqs,bls->bql', q, enc)
  aw = jnp.where(pad_mask[:, None, :], -jnp.inf, aw)
  aw = jax.nn.softmax(aw, axis=2)
  context = jnp.einsum('bql,bls->bqs', aw, enc)
  cat = jnp.concatenate([context, rnn_output], axis=2)
  attn_output = jnp.tanh(jnp.einsum('bqc,tc->bqt', cat, P['w_op']) + P['b_op'])

  gen = jnp.exp(jnp.einsum('bqt,vt->bqv', attn_output, P['w_gen'])[:, 0, :])
  gen = jnp.concatenate([gen, jnp.full((Bq, OOV), 1e-10, jnp.float32)], axis=1)

  cp = jnp.tanh(jnp.einsum('bls,ts->blt', enc, P['w_cp']))
  cs = jnp.einsum('blt,bqt->blq', cp, attn_output)
  cs = jnp.exp(jnp.where(pad_mask[:, :, None], -jnp.inf, cs))
  one_hot = jax.nn.one_hot(src_oov, TV, dtype=jnp.float32)
  copy_vocab = jnp.einsum('blq,blv->bqv', cs, one_hot)[:, 0, :]

  total = gen + copy_vocab
  prob = total / jnp.sum(total, axis=1, keepdims=True)
  return jnp.log(prob), attn_output[:, 0, :], rnn_state


# ------------------------------- params ------------------------------------ #
def init_params(key):
  ks = jax.random.split(key, 10)

  def u(k, shape, scale=0.1):
    return jax.random.uniform(k, shape, jnp.float32, -1.0, 1.0) * scale

  return dict(
      embedding=u(ks[0], (V, E), 0.5),
      w_cp=u(ks[1], (TH, SED)),         # copy_proj       (Linear SED->TH, no bias)
      w_attn=u(ks[2], (SED, TH)),       # Attention.attn  (Linear TH->SED, no bias)
      w_op=u(ks[3], (TH, SED + TH)),    # Attention.output_proj
      b_op=u(ks[4], (TH,)),
      w_gen=u(ks[5], (V, TH)),          # generate_proj (no bias)
      w_ih=u(ks[6], (3 * TH, E)),       # GRU weight_ih_l0 (r|z|n)
      w_hh=u(ks[7], (3 * TH, TH)),      # GRU weight_hh_l0
      b_ih=u(ks[8], (3 * TH,)),
      b_hh=u(ks[9], (3 * TH,)),
  )


if __name__ == "__main__":
  key = jax.random.PRNGKey(0)
  kp, k1, k2, k3, k4 = jax.random.split(key, 5)
  params = init_params(kp)
  weight_slab = jax.block_until_ready(prepack_params(params))   # once per model

  prev_tokens = jnp.array([[V + 2], [5]], dtype=jnp.int32)   # one OOV prev token
  src_oov = jax.random.randint(k1, (B, L), 2, TV).astype(jnp.int32)
  src_oov = src_oov.at[0, 0].set(V + 2).at[1, 3].set(5)      # force copy matches
  pad_mask = jnp.zeros((B, L), dtype=bool).at[:, L - 2:].set(True)
  enc = jax.random.normal(k2, (B, L, SED), jnp.float32) * 0.5
  prev_ctx = jax.random.normal(k3, (B, TH), jnp.float32) * 0.5
  prev_rnn_state = jax.random.normal(k4, (1, B, TH), jnp.float32) * 0.5

  out = copy_rnn_decoder_forward(prev_tokens, enc, pad_mask, prev_ctx,
                                 prev_rnn_state, src_oov, weight_slab)
  out = jax.block_until_ready(out)

  ref = ref_forward(prev_tokens, enc, pad_mask, prev_ctx, prev_rnn_state,
                    src_oov, params)
  for a, b in zip(out, ref):
    assert a.shape == b.shape, (a.shape, b.shape)
    assert bool(jnp.allclose(a, b, rtol=1e-2, atol=1e-2)), \
        float(jnp.max(jnp.abs(a - b)))

  print("KERNEL_OK")
</pallas_src>

<mosaic_0001>
module attributes {stable_mosaic.version = 11 : i64} {
  func.func @copy_rnn_decoder_kernel(%arg0: i32, %arg1: memref<8x128xi32, #tpu.memory_space<vmem>>, %arg2: memref<8x128xf32, #tpu.memory_space<vmem>>, %arg3: memref<8x8x32xf32, #tpu.memory_space<vmem>>, %arg4: memref<280x384xf32, #tpu.memory_space<vmem>>, %arg5: memref<8x256xf32, #tpu.memory_space<vmem>>) attributes {dimension_semantics = [#tpu.dimension_semantics<arbitrary>], iteration_bounds = array<i64: 1>, scalar_prefetch = 0 : i64, scratch_operands = 0 : i64, tpu.core_type = #tpu.core_type<tc>, window_params = [{pipeline_mode = #tpu.pipeline_mode<synchronous>, transform_indices = @transform_0, window_bounds = array<i64: 8, 128>}, {pipeline_mode = #tpu.pipeline_mode<synchronous>, transform_indices = @transform_1, window_bounds = array<i64: 8, 128>}, {pipeline_mode = #tpu.pipeline_mode<synchronous>, transform_indices = @transform_2, window_bounds = array<i64: 8, 8, 32>}, {pipeline_mode = #tpu.pipeline_mode<synchronous>, transform_indices = @transform_3, window_bounds = array<i64: 280, 384>}, {pipeline_mode = #tpu.pipeline_mode<synchronous>, transform_indices = @transform_4, window_bounds = array<i64: 8, 256>}]} {
    %c0 = arith.constant 0 : index
    %c0_0 = arith.constant 0 : index
    %0 = vector.load %arg1[%c0, %c0_0] : memref<8x128xi32, #tpu.memory_space<vmem>>, vector<8x128xi32>
    %1 = vector.extract_strided_slice %0 {offsets = [0, 0], sizes = [8, 8], strides = [1, 1]} : vector<8x128xi32> to vector<8x8xi32>
    %2 = vector.extract_strided_slice %0 {offsets = [0, 8], sizes = [8, 8], strides = [1, 1]} : vector<8x128xi32> to vector<8x8xi32>
    %3 = vector.extract_strided_slice %0 {offsets = [0, 16], sizes = [8, 1], strides = [1, 1]} : vector<8x128xi32> to vector<8x1xi32>
    %c0_1 = arith.constant 0 : index
    %c0_2 = arith.constant 0 : index
    %4 = vector.load %arg2[%c0_1, %c0_2] : memref<8x128xf32, #tpu.memory_space<vmem>>, vector<8x32xf32>
    %c0_3 = arith.constant 0 : index
    %c0_4 = arith.constant 0 : index
    %c0_5 = arith.constant 0 : index
    %5 = vector.load %arg3[%c0_3, %c0_4, %c0_5] : memref<8x8x32xf32, #tpu.memory_space<vmem>>, vector<8x8x32xf32>
    %c64_i32 = arith.constant 64 : i32
    %6 = vector.broadcast %c64_i32 : i32 to vector<8x1xi32>
    %7 = arith.cmpi sge, %3, %6 : vector<8x1xi32>
    %c1_i32 = arith.constant 1 : i32
    %8 = vector.broadcast %c1_i32 : i32 to vector<8x1xi32>
    %9 = arith.select %7, %8, %3 : vector<8x1xi1>, vector<8x1xi32>
    %10 = tpu.iota {dimensions = array<i32: 1>} : vector<8x64xi32>
    %11 = vector.broadcast %9 : vector<8x1xi32> to vector<8x64xi32>
    %12 = arith.cmpi eq, %11, %10 : vector<8x64xi32>
    %13 = arith.extui %12 : vector<8x64xi1> to vector<8x64xi32>
    %14 = arith.sitofp %13 : vector<8x64xi32> to vector<8x64xf32>
    %c0_6 = arith.constant 0 : index
    %c0_7 = arith.constant 0 : index
    %15 = vector.load %arg4[%c0_6, %c0_7] : memref<280x384xf32, #tpu.memory_space<vmem>>, vector<64x384xf32>
    %cst = arith.constant dense<0.000000e+00> : vector<8x384xf32>
    %16 = tpu.matmul %14, %15, %cst {dimension_numbers = #tpu.dot_dimension_numbers<[1], [0], [0], [1], [0, 0, 1, 1], [], []>} : vector<8x64xf32>, vector<64x384xf32>, vector<8x384xf32> -> vector<8x384xf32>
    %c96 = arith.constant 96 : index
    %c0_8 = arith.constant 0 : index
    %17 = vector.load %arg4[%c96, %c0_8] : memref<280x384xf32, #tpu.memory_space<vmem>>, vector<1x384xf32>
    %18 = vector.broadcast %17 : vector<1x384xf32> to vector<8x384xf32>
    %19 = arith.addf %16, %18 : vector<8x384xf32>
    %c64 = arith.constant 64 : index
    %c0_9 = arith.constant 0 : index
    %20 = vector.load %arg4[%c64, %c0_9] : memref<280x384xf32, #tpu.memory_space<vmem>>, vector<32x384xf32>
    %cst_10 = arith.constant dense<0.000000e+00> : vector<8x384xf32>
    %21 = tpu.matmul %4, %20, %cst_10 {dimension_numbers = #tpu.dot_dimension_numbers<[1], [0], [0], [1], [0, 0, 1, 1], [], []>} : vector<8x32xf32>, vector<32x384xf32>, vector<8x384xf32> -> vector<8x384xf32>
    %c104 = arith.constant 104 : index
    %c0_11 = arith.constant 0 : index
    %22 = vector.load %arg4[%c104, %c0_11] : memref<280x384xf32, #tpu.memory_space<vmem>>, vector<1x384xf32>
    %23 = vector.broadcast %22 : vector<1x384xf32> to vector<8x384xf32>
    %24 = arith.addf %21, %23 : vector<8x384xf32>
    %25 = vector.extract_strided_slice %19 {offsets = [0, 0], sizes = [8, 32], strides = [1, 1]} : vector<8x384xf32> to vector<8x32xf32>
    %26 = vector.extract_strided_slice %24 {offsets = [0, 0], sizes = [8, 32], strides = [1, 1]} : vector<8x384xf32> to vector<8x32xf32>
    %27 = arith.addf %25, %26 : vector<8x32xf32>
    %28 = arith.negf %27 : vector<8x32xf32>
    %29 = math.exp %28 : vector<8x32xf32>
    %cst_12 = arith.constant 1.000000e+00 : f32
    %30 = vector.broadcast %cst_12 : f32 to vector<8x32xf32>
    %31 = arith.addf %30, %29 : vector<8x32xf32>
    %32 = arith.divf %30, %31 : vector<8x32xf32>
    %33 = vector.extract_strided_slice %19 {offsets = [0, 128], sizes = [8, 32], strides = [1, 1]} : vector<8x384xf32> to vector<8x32xf32>
    %34 = vector.extract_strided_slice %24 {offsets = [0, 128], sizes = [8, 32], strides = [1, 1]} : vector<8x384xf32> to vector<8x32xf32>
    %35 = arith.addf %33, %34 : vector<8x32xf32>
    %36 = arith.negf %35 : vector<8x32xf32>
    %37 = math.exp %36 : vector<8x32xf32>
    %cst_13 = arith.constant 1.000000e+00 : f32
    %38 = vector.broadcast %cst_13 : f32 to vector<8x32xf32>
    %39 = arith.addf %38, %37 : vector<8x32xf32>
    %40 = arith.divf %38, %39 : vector<8x32xf32>
    %41 = vector.extract_strided_slice %19 {offsets = [0, 256], sizes = [8, 32], strides = [1, 1]} : vector<8x384xf32> to vector<8x32xf32>
    %42 = vector.extract_strided_slice %24 {offsets = [0, 256], sizes = [8, 32], strides = [1, 1]} : vector<8x384xf32> to vector<8x32xf32>
    %43 = arith.mulf %32, %42 : vector<8x32xf32>
    %44 = arith.addf %41, %43 : vector<8x32xf32>
    %45 = math.tanh %44 : vector<8x32xf32>
    %cst_14 = arith.constant 1.000000e+00 : f32
    %46 = vector.broadcast %cst_14 : f32 to vector<8x32xf32>
    %47 = arith.subf %46, %40 : vector<8x32xf32>
    %48 = arith.mulf %47, %45 : vector<8x32xf32>
    %49 = arith.mulf %40, %4 : vector<8x32xf32>
    %50 = arith.addf %48, %49 : vector<8x32xf32>
    %c112 = arith.constant 112 : index
    %c0_15 = arith.constant 0 : index
    %51 = vector.load %arg4[%c112, %c0_15] : memref<280x384xf32, #tpu.memory_space<vmem>>, vector<32x384xf32>
    %cst_16 = arith.constant dense<0.000000e+00> : vector<8x384xf32>
    %52 = tpu.matmul %50, %51, %cst_16 {dimension_numbers = #tpu.dot_dimension_numbers<[1], [0], [0], [1], [0, 0, 1, 1], [], []>} : vector<8x32xf32>, vector<32x384xf32>, vector<8x384xf32> -> vector<8x384xf32>
    %53 = vector.extract_strided_slice %52 {offsets = [0, 0], sizes = [8, 32], strides = [1, 1]} : vector<8x384xf32> to vector<8x32xf32>
    %54 = vector.shape_cast %53 : vector<8x32xf32> to vector<8x1x32xf32>
    %55 = vector.broadcast %54 : vector<8x1x32xf32> to vector<8x8x32xf32>
    %56 = arith.mulf %5, %55 : vector<8x8x32xf32>
    %cst_17 = arith.constant dense<0.000000e+00> : vector<8x8xf32>
    %57 = vector.multi_reduction <add>, %56, %cst_17 [2] : vector<8x8x32xf32> to vector<8x8xf32>
    %c0_i32 = arith.constant 0 : i32
    %58 = vector.broadcast %c0_i32 : i32 to vector<8x8xi32>
    %59 = arith.cmpi sgt, %2, %58 : vector<8x8xi32>
    %cst_18 = arith.constant -1.000000e+30 : f32
    %60 = vector.broadcast %cst_18 : f32 to vector<8x8xf32>
    %61 = arith.select %59, %60, %57 : vector<8x8xi1>, vector<8x8xf32>
    %cst_19 = arith.constant dense<0xFF800000> : vector<8xf32>
    %62 = vector.multi_reduction <maximumf>, %61, %cst_19 [1] : vector<8x8xf32> to vector<8xf32>
    %63 = vector.shape_cast %62 : vector<8xf32> to vector<8x1xf32>
    %64 = vector.broadcast %63 : vector<8x1xf32> to vector<8x8xf32>
    %65 = arith.subf %61, %64 : vector<8x8xf32>
    %66 = math.exp %65 : vector<8x8xf32>
    %cst_20 = arith.constant dense<0.000000e+00> : vector<8xf32>
    %67 = vector.multi_reduction <add>, %66, %cst_20 [1] : vector<8x8xf32> to vector<8xf32>
    %68 = vector.shape_cast %67 : vector<8xf32> to vector<8x1xf32>
    %69 = tpu.reciprocal %68 {approx = true} : vector<8x1xf32> -> vector<8x1xf32>
    %70 = vector.broadcast %69 : vector<8x1xf32> to vector<8x8xf32>
    %71 = arith.mulf %66, %70 : vector<8x8xf32>
    %72 = vector.shape_cast %71 : vector<8x8xf32> to vector<8x8x1xf32>
    %73 = vector.broadcast %72 : vector<8x8x1xf32> to vector<8x8x32xf32>
    %74 = arith.mulf %73, %5 : vector<8x8x32xf32>
    %cst_21 = arith.constant dense<0.000000e+00> : vector<8x32xf32>
    %75 = vector.multi_reduction <add>, %74, %cst_21 [1] : vector<8x8x32xf32> to vector<8x32xf32>
    %c144 = arith.constant 144 : index
    %c0_22 = arith.constant 0 : index
    %76 = vector.load %arg4[%c144, %c0_22] : memref<280x384xf32, #tpu.memory_space<vmem>>, vector<32x384xf32>
    %cst_23 = arith.constant dense<0.000000e+00> : vector<8x384xf32>
    %77 = tpu.matmul %75, %76, %cst_23 {dimension_numbers = #tpu.dot_dimension_numbers<[1], [0], [0], [1], [0, 0, 1, 1], [], []>} : vector<8x32xf32>, vector<32x384xf32>, vector<8x384xf32> -> vector<8x384xf32>
    %c176 = arith.constant 176 : index
    %c0_24 = arith.constant 0 : index
    %78 = vector.load %arg4[%c176, %c0_24] : memref<280x384xf32, #tpu.memory_space<vmem>>, vector<32x384xf32>
    %cst_25 = arith.constant dense<0.000000e+00> : vector<8x384xf32>
    %79 = tpu.matmul %50, %78, %cst_25 {dimension_numbers = #tpu.dot_dimension_numbers<[1], [0], [0], [1], [0, 0, 1, 1], [], []>} : vector<8x32xf32>, vector<32x384xf32>, vector<8x384xf32> -> vector<8x384xf32>
    %80 = arith.addf %77, %79 : vector<8x384xf32>
    %c208 = arith.constant 208 : index
    %c0_26 = arith.constant 0 : index
    %81 = vector.load %arg4[%c208, %c0_26] : memref<280x384xf32, #tpu.memory_space<vmem>>, vector<1x384xf32>
    %82 = vector.broadcast %81 : vector<1x384xf32> to vector<8x384xf32>
    %83 = arith.addf %80, %82 : vector<8x384xf32>
    %84 = vector.extract_strided_slice %83 {offsets = [0, 0], sizes = [8, 32], strides = [1, 1]} : vector<8x384xf32> to vector<8x32xf32>
    %85 = math.tanh %84 : vector<8x32xf32>
    %c216 = arith.constant 216 : index
    %c0_27 = arith.constant 0 : index
    %86 = vector.load %arg4[%c216, %c0_27] : memref<280x384xf32, #tpu.memory_space<vmem>>, vector<32x384xf32>
    %cst_28 = arith.constant dense<0.000000e+00> : vector<8x384xf32>
    %87 = tpu.matmul %85, %86, %cst_28 {dimension_numbers = #tpu.dot_dimension_numbers<[1], [0], [0], [1], [0, 0, 1, 1], [], []>} : vector<8x32xf32>, vector<32x384xf32>, vector<8x384xf32> -> vector<8x384xf32>
    %88 = vector.extract_strided_slice %87 {offsets = [0, 0], sizes = [8, 72], strides = [1, 1]} : vector<8x384xf32> to vector<8x72xf32>
    %89 = tpu.iota {dimensions = array<i32: 1>} : vector<8x72xi32>
    %c64_i32_29 = arith.constant 64 : i32
    %90 = vector.broadcast %c64_i32_29 : i32 to vector<8x72xi32>
    %91 = arith.cmpi slt, %89, %90 : vector<8x72xi32>
    %92 = math.exp %88 : vector<8x72xf32>
    %cst_30 = arith.constant 1.000000e-10 : f32
    %93 = vector.broadcast %cst_30 : f32 to vector<8x72xf32>
    %94 = arith.select %91, %92, %93 : vector<8x72xi1>, vector<8x72xf32>
    %95 = vector.shape_cast %5 : vector<8x8x32xf32> to vector<64x32xf32>
    %c248 = arith.constant 248 : index
    %c0_31 = arith.constant 0 : index
    %96 = vector.load %arg4[%c248, %c0_31] : memref<280x384xf32, #tpu.memory_space<vmem>>, vector<32x384xf32>
    %cst_32 = arith.constant dense<0.000000e+00> : vector<64x384xf32>
    %97 = tpu.matmul %95, %96, %cst_32 {dimension_numbers = #tpu.dot_dimension_numbers<[1], [0], [0], [1], [0, 0, 1, 1], [], []>} : vector<64x32xf32>, vector<32x384xf32>, vector<64x384xf32> -> vector<64x384xf32>
    %98 = vector.extract_strided_slice %97 {offsets = [0, 0], sizes = [64, 32], strides = [1, 1]} : vector<64x384xf32> to vector<64x32xf32>
    %99 = math.tanh %98 : vector<64x32xf32>
    %100 = vector.shape_cast %99 : vector<64x32xf32> to vector<8x8x32xf32>
    %101 = vector.shape_cast %85 : vector<8x32xf32> to vector<8x1x32xf32>
    %102 = vector.broadcast %101 : vector<8x1x32xf32> to vector<8x8x32xf32>
    %103 = arith.mulf %100, %102 : vector<8x8x32xf32>
    %cst_33 = arith.constant dense<0.000000e+00> : vector<8x8xf32>
    %104 = vector.multi_reduction <add>, %103, %cst_33 [2] : vector<8x8x32xf32> to vector<8x8xf32>
    %c0_i32_34 = arith.constant 0 : i32
    %105 = vector.broadcast %c0_i32_34 : i32 to vector<8x8xi32>
    %106 = arith.cmpi sgt, %2, %105 : vector<8x8xi32>
    %107 = math.exp %104 : vector<8x8xf32>
    %cst_35 = arith.constant 0.000000e+00 : f32
    %108 = vector.broadcast %cst_35 : f32 to vector<8x8xf32>
    %109 = arith.select %106, %108, %107 : vector<8x8xi1>, vector<8x8xf32>
    %110 = tpu.iota {dimensions = array<i32: 2>} : vector<8x8x72xi32>
    %111 = vector.shape_cast %1 : vector<8x8xi32> to vector<8x8x1xi32>
    %112 = vector.broadcast %111 : vector<8x8x1xi32> to vector<8x8x72xi32>
    %113 = arith.cmpi eq, %112, %110 : vector<8x8x72xi32>
    %114 = vector.shape_cast %109 : vector<8x8xf32> to vector<8x8x1xf32>
    %cst_36 = arith.constant 0.000000e+00 : f32
    %115 = vector.shape_cast %114 : vector<8x8x1xf32> to vector<8x8x1xf32>
    %116 = vector.broadcast %115 : vector<8x8x1xf32> to vector<8x8x72xf32>
    %117 = vector.broadcast %cst_36 : f32 to vector<8x8x72xf32>
    %118 = arith.select %113, %116, %117 : vector<8x8x72xi1>, vector<8x8x72xf32>
    %cst_37 = arith.constant dense<0.000000e+00> : vector<8x72xf32>
    %119 = vector.multi_reduction <add>, %118, %cst_37 [1] : vector<8x8x72xf32> to vector<8x72xf32>
    %120 = arith.addf %94, %119 : vector<8x72xf32>
    %121 = math.log %120 : vector<8x72xf32>
    %cst_38 = arith.constant dense<0.000000e+00> : vector<8xf32>
    %122 = vector.multi_reduction <add>, %120, %cst_38 [1] : vector<8x72xf32> to vector<8xf32>
    %123 = vector.shape_cast %122 : vector<8xf32> to vector<8x1xf32>
    %124 = math.log %123 : vector<8x1xf32>
    %125 = vector.broadcast %124 : vector<8x1xf32> to vector<8x72xf32>
    %126 = arith.subf %121, %125 : vector<8x72xf32>
    %cst_39 = arith.constant 0.000000e+00 : f32
    %127 = vector.broadcast %cst_39 : f32 to vector<8x56xf32>
    %cst_40 = arith.constant 0.000000e+00 : f32
    %128 = vector.broadcast %cst_40 : f32 to vector<8x64xf32>
    %129 = tpu.concatenate %126, %127, %85, %50, %128 in 1 : vector<8x72xf32>, vector<8x56xf32>, vector<8x32xf32>, vector<8x32xf32>, vector<8x64xf32> -> vector<8x256xf32>
    %c0_41 = arith.constant 0 : index
    %c0_42 = arith.constant 0 : index
    %130 = vector.load %arg5[%c0_41, %c0_42] : memref<8x256xf32, #tpu.memory_space<vmem>>, vector<8x256xf32>
    tpu.vector_store %arg5[%c0_41, %c0_42], %129 {strides = array<i32>} : memref<8x256xf32, #tpu.memory_space<vmem>>, vector<8x256xf32>,
    return
  }
  func.func @transform_0(%arg0: i32) -> (i32, i32) {
    %c0_i32 = arith.constant 0 : i32
    %c0_i32_0 = arith.constant 0 : i32
    %c0_i32_1 = arith.constant 0 : i32
    return %c0_i32, %c0_i32_0 : i32, i32
  }
  func.func @transform_1(%arg0: i32) -> (i32, i32) {
    %c0_i32 = arith.constant 0 : i32
    %c0_i32_0 = arith.constant 0 : i32
    %c0_i32_1 = arith.constant 0 : i32
    return %c0_i32, %c0_i32_0 : i32, i32
  }
  func.func @transform_2(%arg0: i32) -> (i32, i32, i32) {
    %c0_i32 = arith.constant 0 : i32
    %c0_i32_0 = arith.constant 0 : i32
    %c0_i32_1 = arith.constant 0 : i32
    %c0_i32_2 = arith.constant 0 : i32
    return %c0_i32, %c0_i32_0, %c0_i32_1 : i32, i32, i32
  }
  func.func @transform_3(%arg0: i32) -> (i32, i32) {
    %c0_i32 = arith.constant 0 : i32
    %c0_i32_0 = arith.constant 0 : i32
    %c0_i32_1 = arith.constant 0 : i32
    return %c0_i32, %c0_i32_0 : i32, i32
  }
  func.func @transform_4(%arg0: i32) -> (i32, i32) {
    %c0_i32 = arith.constant 0 : i32
    %c0_i32_0 = arith.constant 0 : i32
    %c0_i32_1 = arith.constant 0 : i32
    return %c0_i32, %c0_i32_0 : i32, i32
  }
}

</mosaic_0001>

<llo_original>
// kernel: tpu_custom_call.1
$region0: #{tpu_custom_call.1}
  #allocation0 [shape = 'u32[]', space=smem, size = 0x4, offset = 0x4, fixed_abs, tag = 'smem constant byte address 0x4 - core index']
  #allocation1 [shape = 'u32[144,128]{1,0:T(1,128)}', space=vmem, size = 0x12000, scoped, tag = 'internal scratch']
  %s0 = inlined_call_operand.hbm [shape: s32[8,128], index: 0, kind: input, shape index: {}]
  %s1 = inlined_call_operand.hbm [shape: f32[8,128], index: 1, kind: input, shape index: {}]
  %s2 = inlined_call_operand.hbm [shape: f32[8,8,32], index: 2, kind: input, shape index: {}]
  %s3 = inlined_call_operand.hbm [shape: f32[280,384], index: 3, kind: input, shape index: {}]
  %s4 = inlined_call_operand.hbm [shape: f32[8,256], index: 4, kind: output, shape index: {}]
  %s5 = sld [smem:[#allocation0]]
  $region42: #{tpu_custom_call.1} parent=0
    _
  %s7 = ssub.s32 1, %s5
  %s8 = scalar_select 0, %s7, %s5
  $region1: #{tpu_custom_call.1} parent=0
    #allocation2 [shape = 'u8[4096]{0}', space=vmem, size = 0x1000, scoped, tag = 'input window, operand 0, single buffered']
    #allocation3 [shape = 's32[1]{0}', space=sflag, size = 0x4, scoped, tag = 'scoped memory for tpu_custom_call.1']
    #allocation4 [shape = 's32[1]{0}', space=sflag, size = 0x4, scoped, tag = 'scoped memory for tpu_custom_call.1']
    #allocation5 [shape = 'u8[4096]{0}', space=vmem, size = 0x1000, scoped, tag = 'input window, operand 1, single buffered']
    #allocation6 [shape = 's32[1]{0}', space=sflag, size = 0x4, scoped, tag = 'scoped memory for tpu_custom_call.1']
    #allocation7 [shape = 'u8[32768]{0}', space=vmem, size = 0x8000, scoped, tag = 'input window, operand 2, single buffered']
    #allocation8 [shape = 'u8[430080]{0}', space=vmem, size = 0x69000, scoped, tag = 'input window, operand 3, single buffered']
    #allocation9 [shape = 's32[1]{0}', space=sflag, size = 0x4, scoped, tag = 'scoped memory for tpu_custom_call.1']
    #allocation10 [shape = 'u8[8192]{0}', space=vmem, size = 0x2000, scoped, tag = 'output window, operand 0, single buffered']
    %9 = vsyncpa [#allocation3], 0
    %10 = vsyncpa [#allocation6], 0
    %11 = vsyncpa [#allocation9], 0
    %12 = vsyncpa [#allocation4], 0
    // Predicated region
    $region2: #{tpu_custom_call.1} parent=1 // pred_check
      _
    $region3: #{tpu_custom_call.1} parent=1 // pred_check_branch
      %14 = sbr.rel (0) target = $region5
    $region4: #{tpu_custom_call.1} parent=1 // pred_region
      %s16 = ssub.s32 128, 128
      %17 = vsyncadd [#allocation3], %s16
      %s19 = sshll.u32 [#allocation2], 4
      %s20 = int_to_ptr.vmem [resolvable:$true] %s19
      %22 = dma.hbm_to_vmem [thread:$0]  %s0, 128, %s20, [#allocation3]
    $region5: #{tpu_custom_call.1} parent=1 // pred_fallthru
      _
    // Predicated region
    $region6: #{tpu_custom_call.1} parent=1 // pred_check
      _
    $region7: #{tpu_custom_call.1} parent=1 // pred_check_branch
      %24 = sbr.rel (0) target = $region9
    $region8: #{tpu_custom_call.1} parent=1 // pred_region
      %s26 = ssub.s32 128, 128
      %27 = vsyncadd [#allocation6], %s26
      %s29 = sshll.u32 [#allocation5], 4
      %s30 = int_to_ptr.vmem [resolvable:$true] %s29
      %32 = dma.hbm_to_vmem [thread:$0]  %s1, 128, %s30, [#allocation6]
    $region9: #{tpu_custom_call.1} parent=1 // pred_fallthru
      _
    // Predicated region
    $region10: #{tpu_custom_call.1} parent=1 // pred_check
      _
    $region11: #{tpu_custom_call.1} parent=1 // pred_check_branch
      %34 = sbr.rel (0) target = $region13
    $region12: #{tpu_custom_call.1} parent=1 // pred_region
      %s36 = ssub.s32 1024, 1024
      %37 = vsyncadd [#allocation6], %s36
      %s38 = sshll.u32 [#allocation7], 4
      %s39 = int_to_ptr.vmem [resolvable:$true] %s38
      %44 = dma.hbm_to_vmem [thread:$0]  %s2, 1024, %s39, [#allocation6], 128, 128, 8
    $region13: #{tpu_custom_call.1} parent=1 // pred_fallthru
      _
    // Predicated region
    $region14: #{tpu_custom_call.1} parent=1 // pred_check
      _
    $region15: #{tpu_custom_call.1} parent=1 // pred_check_branch
      %46 = sbr.rel (0) target = $region17
    $region16: #{tpu_custom_call.1} parent=1 // pred_region
      %s48 = ssub.s32 13440, 13440
      %49 = vsyncadd [#allocation9], %s48
      %s50 = sshll.u32 [#allocation8], 4
      %s51 = int_to_ptr.vmem [resolvable:$true] %s50
      %56 = dma.hbm_to_vmem [thread:$0]  %s3, 13440, %s51, [#allocation9], 384, 384, 24
    $region17: #{tpu_custom_call.1} parent=1 // pred_fallthru
      _
    // Predicated region
    $region18: #{tpu_custom_call.1} parent=1 // pred_check
      _
    $region19: #{tpu_custom_call.1} parent=1 // pred_check_branch
      %58 = sbr.rel (0) target = $region21
    $region20: #{tpu_custom_call.1} parent=1 // pred_region
      %59 = dma.done [#allocation3], 128
    $region21: #{tpu_custom_call.1} parent=1 // pred_fallthru
      _
    // Predicated region
    $region22: #{tpu_custom_call.1} parent=1 // pred_check
      _
    $region23: #{tpu_custom_call.1} parent=1 // pred_check_branch
      %61 = sbr.rel (0) target = $region25
    $region24: #{tpu_custom_call.1} parent=1 // pred_region
      %62 = dma.done [#allocation6], 128
    $region25: #{tpu_custom_call.1} parent=1 // pred_fallthru
      _
    // Predicated region
    $region26: #{tpu_custom_call.1} parent=1 // pred_check
      _
    $region27: #{tpu_custom_call.1} parent=1 // pred_check_branch
      %64 = sbr.rel (0) target = $region29
    $region28: #{tpu_custom_call.1} parent=1 // pred_region
      %65 = dma.done [#allocation6], 1024
    $region29: #{tpu_custom_call.1} parent=1 // pred_fallthru
      _
    // Predicated region
    $region30: #{tpu_custom_call.1} parent=1 // pred_check
      _
    $region31: #{tpu_custom_call.1} parent=1 // pred_check_branch
      %67 = sbr.rel (0) target = $region33
    $region32: #{tpu_custom_call.1} parent=1 // pred_region
      %68 = dma.done [#allocation9], 13440
    $region33: #{tpu_custom_call.1} parent=1 // pred_fallthru
      _
    %v69 = vld [vmem:[#allocation2] sm:$0xff]
    %v70 = vld [vmem:[#allocation5] sm:$0xff]
    %v71 = vld [vmem:[#allocation7] sm:$0xff]
    %v72 = vld [vmem:[#allocation7 + $0x8] sm:$0xff]
    %v73 = vld [vmem:[#allocation7 + $0x10] sm:$0xff]
    %v74 = vld [vmem:[#allocation7 + $0x18] sm:$0xff]
    %v75 = vld [vmem:[#allocation7 + $0x20] sm:$0xff]
    %v76 = vld [vmem:[#allocation7 + $0x28] sm:$0xff]
    %v77 = vld [vmem:[#allocation7 + $0x30] sm:$0xff]
    %v78 = vld [vmem:[#allocation7 + $0x38] sm:$0xff]
    %vm79 = vcmp.ge.s32.totalorder %v69, 64
    %v80 = vsel %vm79, 1, %v69
    %v81 = vlaneseq
    %v82 = vand.u32 %v81, 127
    %83 = vset.pattern.permute.xlu0 16
    %84 = vperm.xlu0 %83, %v80
    %v85 = vpop.permute.xlu0 %84
    %vm86 = vcmp.eq.s32.totalorder %v85, %v82
    %v87 = vsel %vm86, 1, 0
    %v88 = vcvt.s32.f32 %v87
    %v89 = vld [vmem:[#allocation8] sm:$0xff]
    %v90 = vld [vmem:[#allocation8 + $0x8] sm:$0xff]
    %v91 = vld [vmem:[#allocation8 + $0x10] sm:$0xff]
    %v92 = vld [vmem:[#allocation8 + $0x18] sm:$0xff]
    %v93 = vld [vmem:[#allocation8 + $0x20] sm:$0xff]
    %v94 = vld [vmem:[#allocation8 + $0x28] sm:$0xff]
    %v95 = vld [vmem:[#allocation8 + $0x30] sm:$0xff]
    %v96 = vld [vmem:[#allocation8 + $0x38] sm:$0xff]
    %v97 = vld [vmem:[#allocation8 + $0x40] sm:$0xff]
    %v98 = vld [vmem:[#allocation8 + $0x48] sm:$0xff]
    %v99 = vld [vmem:[#allocation8 + $0x50] sm:$0xff]
    %v100 = vld [vmem:[#allocation8 + $0x58] sm:$0xff]
    %v101 = vld [vmem:[#allocation8 + $0x60] sm:$0xff]
    %v102 = vld [vmem:[#allocation8 + $0x68] sm:$0xff]
    %v103 = vld [vmem:[#allocation8 + $0x70] sm:$0xff]
    %v104 = vld [vmem:[#allocation8 + $0x78] sm:$0xff]
    %v105 = vld [vmem:[#allocation8 + $0x80] sm:$0xff]
    %v106 = vld [vmem:[#allocation8 + $0x88] sm:$0xff]
    %v107 = vld [vmem:[#allocation8 + $0x90] sm:$0xff]
    %v108 = vld [vmem:[#allocation8 + $0x98] sm:$0xff]
    %v109 = vld [vmem:[#allocation8 + $0xa0] sm:$0xff]
    %v110 = vld [vmem:[#allocation8 + $0xa8] sm:$0xff]
    %v111 = vld [vmem:[#allocation8 + $0xb0] sm:$0xff]
    %v112 = vld [vmem:[#allocation8 + $0xb8] sm:$0xff]
    %s113 = scalar_lea.vmem [#allocation8], 288
    %v114 = vld [vmem:[%s113] ss:$8 sm:$0x7]
    %v116 = vlaneseq
    %v117 = vshrl.u32 %v116, 7
    %v118 = vsub.s32 0, %v117
    %v119 = vrot.slane %v114, %v118
    %v120 = vlaneseq
    %v121 = vshrl.u32 %v120, 7
    %v122 = vsub.s32 1, %v121
    %v123 = vrot.slane %v114, %v122
    %v124 = vlaneseq
    %v125 = vshrl.u32 %v124, 7
    %v126 = vsub.s32 2, %v125
    %v127 = vrot.slane %v114, %v126
    %vm131 = vcmask 523264
    %v133 = vsel %vm131, %v88, 0
    %135 = vmatprep.subr.mxu0 0.0
    %136 = vmatpush1.msra.mxu0 0.0
    %137 = vmatprep.subr.mxu0 0.0
    %138 = vmatpush1.msra.mxu0 0.0
    %139 = vmatprep.subr.mxu0 0.0
    %140 = vmatpush1.msra.mxu0 0.0
    %141 = vmatprep.subr.mxu0 0.0
    %142 = vmatpush1.msra.mxu0 0.0
    %143 = vmatprep.subr.mxu0 0.0
    %144 = vmatpush1.msra.mxu0 0.0
    %145 = vmatprep.subr.mxu0 0.0
    %146 = vmatpush1.msra.mxu0 0.0
    %147 = vmatprep.subr.mxu0 0.0
    %148 = vmatpush1.msra.mxu0 0.0
    %149 = vmatprep.subr.mxu0 0.0
    %150 = vmatpush1.msra.mxu0 0.0
    %151 = vmatprep.subr.mxu0 %v111
    %152 = vmatpush1.msra.mxu0 %v110
    %153 = vmatprep.subr.mxu0 %v108
    %154 = vmatpush1.msra.mxu0 %v107
    %155 = vmatprep.subr.mxu0 %v105
    %156 = vmatpush1.msra.mxu0 %v104
    %157 = vmatprep.subr.mxu0 %v102
    %158 = vmatpush1.msra.mxu0 %v101
    %159 = vmatprep.subr.mxu0 %v99
    %160 = vmatpush1.msra.mxu0 %v98
    %161 = vmatprep.subr.mxu0 %v96
    %162 = vmatpush1.msra.mxu0 %v95
    %163 = vmatprep.subr.mxu0 %v93
    %164 = vmatpush1.msra.mxu0 %v92
    %165 = vmatprep.subr.mxu0 %v90
    %166 = vmatpush1.msra.mxu0 %v89
    %167 = vmatprep.subr.mxu0 0.0
    %168 = vmatpush2.msra.mxu0 0.0
    %169 = vmatprep.subr.mxu0 0.0
    %170 = vmatpush2.msra.mxu0 0.0
    %171 = vmatprep.subr.mxu0 0.0
    %172 = vmatpush2.msra.mxu0 0.0
    %173 = vmatprep.subr.mxu0 0.0
    %174 = vmatpush2.msra.mxu0 0.0
    %175 = vmatprep.subr.mxu0 0.0
    %176 = vmatpush2.msra.mxu0 0.0
    %177 = vmatprep.subr.mxu0 0.0
    %178 = vmatpush2.msra.mxu0 0.0
    %179 = vmatprep.subr.mxu0 0.0
    %180 = vmatpush2.msra.mxu0 0.0
    %181 = vmatprep.subr.mxu0 0.0
    %182 = vmatpush2.msra.mxu0 0.0
    %183 = vmatprep.subr.mxu0 0.0
    %184 = vmatpush2.msra.mxu0 0.0
    %185 = vmatprep.subr.mxu0 0.0
    %186 = vmatpush2.msra.mxu0 0.0
    %187 = vmatprep.subr.mxu0 0.0
    %188 = vmatpush2.msra.mxu0 0.0
    %189 = vmatprep.subr.mxu0 0.0
    %190 = vmatpush2.msra.mxu0 0.0
    %191 = vmatprep.subr.mxu0 0.0
    %192 = vmatpush2.msra.mxu0 0.0
    %193 = vmatprep.subr.mxu0 0.0
    %194 = vmatpush2.msra.mxu0 0.0
    %195 = vmatprep.subr.mxu0 0.0
    %196 = vmatpush2.msra.mxu0 0.0
    %197 = vmatprep.subr.mxu0 0.0
    %198 = vmatpush2.msra.mxu0 0.0
    %199 = vmatprep.mubr.f32.mxu0 0.0
    %200 = vmatmul.mubr.f32.gmra.mxu0 %v133
    %v201 = vpop.f32.mrf.mxu0
    %v202 = vadd.f32 %v119, %v201
    %v203 = vpop.f32.mrf.mxu0
    %v204 = vadd.f32 %v123, %v203
    %205 = vdwg.mxu0
    %206 = vmatprep.subr.mxu0 0.0
    %207 = vmatpush1.msra.mxu0 0.0
    %208 = vmatprep.subr.mxu0 0.0
    %209 = vmatpush1.msra.mxu0 0.0
    %210 = vmatprep.subr.mxu0 0.0
    %211 = vmatpush1.msra.mxu0 0.0
    %212 = vmatprep.subr.mxu0 0.0
    %213 = vmatpush1.msra.mxu0 0.0
    %214 = vmatprep.subr.mxu0 0.0
    %215 = vmatpush1.msra.mxu0 0.0
    %216 = vmatprep.subr.mxu0 0.0
    %217 = vmatpush1.msra.mxu0 0.0
    %218 = vmatprep.subr.mxu0 0.0
    %219 = vmatpush1.msra.mxu0 0.0
    %220 = vmatprep.subr.mxu0 0.0
    %221 = vmatpush1.msra.mxu0 0.0
    %222 = vmatprep.subr.mxu0 0.0
    %223 = vmatpush1.msra.mxu0 %v112
    %224 = vmatprep.subr.mxu0 0.0
    %225 = vmatpush1.msra.mxu0 %v109
    %226 = vmatprep.subr.mxu0 0.0
    %227 = vmatpush1.msra.mxu0 %v106
    %228 = vmatprep.subr.mxu0 0.0
    %229 = vmatpush1.msra.mxu0 %v103
    %230 = vmatprep.subr.mxu0 0.0
    %231 = vmatpush1.msra.mxu0 %v100
    %232 = vmatprep.subr.mxu0 0.0
    %233 = vmatpush1.msra.mxu0 %v97
    %234 = vmatprep.subr.mxu0 0.0
    %235 = vmatpush1.msra.mxu0 %v94
    %236 = vmatprep.subr.mxu0 0.0
    %237 = vmatpush1.msra.mxu0 %v91
    %238 = vmatprep.subr.mxu0 0.0
    %239 = vmatpush2.msra.mxu0 0.0
    %240 = vmatprep.subr.mxu0 0.0
    %241 = vmatpush2.msra.mxu0 0.0
    %242 = vmatprep.subr.mxu0 0.0
    %243 = vmatpush2.msra.mxu0 0.0
    %244 = vmatprep.subr.mxu0 0.0
    %245 = vmatpush2.msra.mxu0 0.0
    %246 = vmatprep.subr.mxu0 0.0
    %247 = vmatpush2.msra.mxu0 0.0
    %248 = vmatprep.subr.mxu0 0.0
    %249 = vmatpush2.msra.mxu0 0.0
    %250 = vmatprep.subr.mxu0 0.0
    %251 = vmatpush2.msra.mxu0 0.0
    %252 = vmatprep.subr.mxu0 0.0
    %253 = vmatpush2.msra.mxu0 0.0
    %254 = vmatprep.subr.mxu0 0.0
    %255 = vmatpush2.msra.mxu0 0.0
    %256 = vmatprep.subr.mxu0 0.0
    %257 = vmatpush2.msra.mxu0 0.0
    %258 = vmatprep.subr.mxu0 0.0
    %259 = vmatpush2.msra.mxu0 0.0
    %260 = vmatprep.subr.mxu0 0.0
    %261 = vmatpush2.msra.mxu0 0.0
    %262 = vmatprep.subr.mxu0 0.0
    %263 = vmatpush2.msra.mxu0 0.0
    %264 = vmatprep.subr.mxu0 0.0
    %265 = vmatpush2.msra.mxu0 0.0
    %266 = vmatprep.subr.mxu0 0.0
    %267 = vmatpush2.msra.mxu0 0.0
    %268 = vmatprep.subr.mxu0 0.0
    %269 = vmatpush2.msra.mxu0 0.0
    %270 = vmatprep.mubr.f32.mxu0 0.0
    %271 = vmatmul.mubr.f32.gmra.mxu0 %v133
    %v272 = vpop.f32.mrf.mxu0
    %v273 = vadd.f32 %v127, %v272
    %v274 = vpop.f32.mrf.mxu0
    %275 = vdwg.mxu0
    %v276 = vld [vmem:[#allocation8 + $0xc0] sm:$0xff]
    %v277 = vld [vmem:[#allocation8 + $0xc8] sm:$0xff]
    %v278 = vld [vmem:[#allocation8 + $0xd0] sm:$0xff]
    %v279 = vld [vmem:[#allocation8 + $0xd8] sm:$0xff]
    %v280 = vld [vmem:[#allocation8 + $0xe0] sm:$0xff]
    %v281 = vld [vmem:[#allocation8 + $0xe8] sm:$0xff]
    %v282 = vld [vmem:[#allocation8 + $0xf0] sm:$0xff]
    %v283 = vld [vmem:[#allocation8 + $0xf8] sm:$0xff]
    %v284 = vld [vmem:[#allocation8 + $0x100] sm:$0xff]
    %v285 = vld [vmem:[#allocation8 + $0x108] sm:$0xff]
    %v286 = vld [vmem:[#allocation8 + $0x110] sm:$0xff]
    %v287 = vld [vmem:[#allocation8 + $0x118] sm:$0xff]
    %s288 = scalar_lea.vmem [#allocation8], 312
    %v289 = vld [vmem:[%s288] ss:$8 sm:$0x7]
    %v291 = vlaneseq
    %v292 = vshrl.u32 %v291, 7
    %v293 = vsub.s32 0, %v292
    %v294 = vrot.slane %v289, %v293
    %v295 = vlaneseq
    %v296 = vshrl.u32 %v295, 7
    %v297 = vsub.s32 1, %v296
    %v298 = vrot.slane %v289, %v297
    %v299 = vlaneseq
    %v300 = vshrl.u32 %v299, 7
    %v301 = vsub.s32 2, %v300
    %v302 = vrot.slane %v289, %v301
    %vm306 = vcmask 261120
    %v308 = vsel %vm306, %v70, 0
    %310 = vmatprep.subr.mxu0 0.0
    %311 = vmatpush1.msra.mxu0 0.0
    %312 = vmatprep.subr.mxu0 0.0
    %313 = vmatpush1.msra.mxu0 0.0
    %314 = vmatprep.subr.mxu0 0.0
    %315 = vmatpush1.msra.mxu0 0.0
    %316 = vmatprep.subr.mxu0 0.0
    %317 = vmatpush1.msra.mxu0 0.0
    %318 = vmatprep.subr.mxu0 0.0
    %319 = vmatpush1.msra.mxu0 0.0
    %320 = vmatprep.subr.mxu0 0.0
    %321 = vmatpush1.msra.mxu0 0.0
    %322 = vmatprep.subr.mxu0 0.0
    %323 = vmatpush1.msra.mxu0 0.0
    %324 = vmatprep.subr.mxu0 0.0
    %325 = vmatpush1.msra.mxu0 0.0
    %326 = vmatprep.subr.mxu0 0.0
    %327 = vmatpush1.msra.mxu0 0.0
    %328 = vmatprep.subr.mxu0 0.0
    %329 = vmatpush1.msra.mxu0 0.0
    %330 = vmatprep.subr.mxu0 0.0
    %331 = vmatpush1.msra.mxu0 0.0
    %332 = vmatprep.subr.mxu0 0.0
    %333 = vmatpush1.msra.mxu0 0.0
    %334 = vmatprep.subr.mxu0 %v286
    %335 = vmatpush1.msra.mxu0 %v285
    %336 = vmatprep.subr.mxu0 %v283
    %337 = vmatpush1.msra.mxu0 %v282
    %338 = vmatprep.subr.mxu0 %v280
    %339 = vmatpush1.msra.mxu0 %v279
    %340 = vmatprep.subr.mxu0 %v277
    %341 = vmatpush1.msra.mxu0 %v276
    %342 = vmatprep.subr.mxu0 0.0
    %343 = vmatpush2.msra.mxu0 0.0
    %344 = vmatprep.subr.mxu0 0.0
    %345 = vmatpush2.msra.mxu0 0.0
    %346 = vmatprep.subr.mxu0 0.0
    %347 = vmatpush2.msra.mxu0 0.0
    %348 = vmatprep.subr.mxu0 0.0
    %349 = vmatpush2.msra.mxu0 0.0
    %350 = vmatprep.subr.mxu0 0.0
    %351 = vmatpush2.msra.mxu0 0.0
    %352 = vmatprep.subr.mxu0 0.0
    %353 = vmatpush2.msra.mxu0 0.0
    %354 = vmatprep.subr.mxu0 0.0
    %355 = vmatpush2.msra.mxu0 0.0
    %356 = vmatprep.subr.mxu0 0.0
    %357 = vmatpush2.msra.mxu0 0.0
    %358 = vmatprep.subr.mxu0 0.0
    %359 = vmatpush2.msra.mxu0 0.0
    %360 = vmatprep.subr.mxu0 0.0
    %361 = vmatpush2.msra.mxu0 0.0
    %362 = vmatprep.subr.mxu0 0.0
    %363 = vmatpush2.msra.mxu0 0.0
    %364 = vmatprep.subr.mxu0 0.0
    %365 = vmatpush2.msra.mxu0 0.0
    %366 = vmatprep.subr.mxu0 0.0
    %367 = vmatpush2.msra.mxu0 0.0
    %368 = vmatprep.subr.mxu0 0.0
    %369 = vmatpush2.msra.mxu0 0.0
    %370 = vmatprep.subr.mxu0 0.0
    %371 = vmatpush2.msra.mxu0 0.0
    %372 = vmatprep.subr.mxu0 0.0
    %373 = vmatpush2.msra.mxu0 0.0
    %374 = vmatprep.mubr.f32.mxu0 0.0
    %375 = vmatmul.mubr.f32.gmra.mxu0 %v308
    %v376 = vpop.f32.mrf.mxu0
    %v377 = vadd.f32 %v294, %v376
    %v378 = vpop.f32.mrf.mxu0
    %v379 = vadd.f32 %v298, %v378
    %380 = vdwg.mxu0
    %381 = vmatprep.subr.mxu0 0.0
    %382 = vmatpush1.msra.mxu0 0.0
    %383 = vmatprep.subr.mxu0 0.0
    %384 = vmatpush1.msra.mxu0 0.0
    %385 = vmatprep.subr.mxu0 0.0
    %386 = vmatpush1.msra.mxu0 0.0
    %387 = vmatprep.subr.mxu0 0.0
    %388 = vmatpush1.msra.mxu0 0.0
    %389 = vmatprep.subr.mxu0 0.0
    %390 = vmatpush1.msra.mxu0 0.0
    %391 = vmatprep.subr.mxu0 0.0
    %392 = vmatpush1.msra.mxu0 0.0
    %393 = vmatprep.subr.mxu0 0.0
    %394 = vmatpush1.msra.mxu0 0.0
    %395 = vmatprep.subr.mxu0 0.0
    %396 = vmatpush1.msra.mxu0 0.0
    %397 = vmatprep.subr.mxu0 0.0
    %398 = vmatpush1.msra.mxu0 0.0
    %399 = vmatprep.subr.mxu0 0.0
    %400 = vmatpush1.msra.mxu0 0.0
    %401 = vmatprep.subr.mxu0 0.0
    %402 = vmatpush1.msra.mxu0 0.0
    %403 = vmatprep.subr.mxu0 0.0
    %404 = vmatpush1.msra.mxu0 0.0
    %405 = vmatprep.subr.mxu0 0.0
    %406 = vmatpush1.msra.mxu0 %v287
    %407 = vmatprep.subr.mxu0 0.0
    %408 = vmatpush1.msra.mxu0 %v284
    %409 = vmatprep.subr.mxu0 0.0
    %410 = vmatpush1.msra.mxu0 %v281
    %411 = vmatprep.subr.mxu0 0.0
    %412 = vmatpush1.msra.mxu0 %v278
    %413 = vmatprep.subr.mxu0 0.0
    %414 = vmatpush2.msra.mxu0 0.0
    %415 = vmatprep.subr.mxu0 0.0
    %416 = vmatpush2.msra.mxu0 0.0
    %417 = vmatprep.subr.mxu0 0.0
    %418 = vmatpush2.msra.mxu0 0.0
    %419 = vmatprep.subr.mxu0 0.0
    %420 = vmatpush2.msra.mxu0 0.0
    %421 = vmatprep.subr.mxu0 0.0
    %422 = vmatpush2.msra.mxu0 0.0
    %423 = vmatprep.subr.mxu0 0.0
    %424 = vmatpush2.msra.mxu0 0.0
    %425 = vmatprep.subr.mxu0 0.0
    %426 = vmatpush2.msra.mxu0 0.0
    %427 = vmatprep.subr.mxu0 0.0
    %428 = vmatpush2.msra.mxu0 0.0
    %429 = vmatprep.subr.mxu0 0.0
    %430 = vmatpush2.msra.mxu0 0.0
    %431 = vmatprep.subr.mxu0 0.0
    %432 = vmatpush2.msra.mxu0 0.0
    %433 = vmatprep.subr.mxu0 0.0
    %434 = vmatpush2.msra.mxu0 0.0
    %435 = vmatprep.subr.mxu0 0.0
    %436 = vmatpush2.msra.mxu0 0.0
    %437 = vmatprep.subr.mxu0 0.0
    %438 = vmatpush2.msra.mxu0 0.0
    %439 = vmatprep.subr.mxu0 0.0
    %440 = vmatpush2.msra.mxu0 0.0
    %441 = vmatprep.subr.mxu0 0.0
    %442 = vmatpush2.msra.mxu0 0.0
    %443 = vmatprep.subr.mxu0 0.0
    %444 = vmatpush2.msra.mxu0 0.0
    %445 = vmatprep.mubr.f32.mxu0 0.0
    %446 = vmatmul.mubr.f32.gmra.mxu0 %v308
    %v447 = vpop.f32.mrf.mxu0
    %v448 = vadd.f32 %v302, %v447
    %v449 = vpop.f32.mrf.mxu0
    %450 = vdwg.mxu0
    %v451 = vadd.f32 %v202, %v377
    %v452 = vxor.u32 %v451, 2147483648
    %v453 = vmul.f32 %v452, 1.442695
    %v454 = vpow.pop %v453
    %v455 = vadd.f32 %v454, 1.0
    %v456 = vrcp.pop %v455
    %v457 = vmul.f32 1.0, %v456
    %v458 = vadd.f32 %v204, %v379
    %v459 = vxor.u32 %v458, 2147483648
    %v460 = vmul.f32 %v459, 1.442695
    %v461 = vpow.pop %v460
    %v462 = vadd.f32 %v461, 1.0
    %v463 = vrcp.pop %v462
    %v464 = vmul.f32 1.0, %v463
    %v465 = vmul.f32 %v457, %v448
    %v466 = vadd.f32 %v273, %v465
    %v467 = vtanh.pop %v466
    %v468 = vsub.f32 1.0, %v464
    %v469 = vmul.f32 %v468, %v467
    %v470 = vmul.f32 %v464, %v70
    %v471 = vadd.f32 %v469, %v470
    %v472 = vld [vmem:[#allocation8 + $0x150] sm:$0xff]
    %v473 = vld [vmem:[#allocation8 + $0x158] sm:$0xff]
    %v474 = vld [vmem:[#allocation8 + $0x168] sm:$0xff]
    %v475 = vld [vmem:[#allocation8 + $0x170] sm:$0xff]
    %v476 = vld [vmem:[#allocation8 + $0x180] sm:$0xff]
    %v477 = vld [vmem:[#allocation8 + $0x188] sm:$0xff]
    %v478 = vld [vmem:[#allocation8 + $0x198] sm:$0xff]
    %v479 = vld [vmem:[#allocation8 + $0x1a0] sm:$0xff]
    %v481 = vsel %vm306, %v471, 0
    %483 = vmatprep.subr.mxu0 0.0
    %484 = vmatpush1.msra.mxu0 0.0
    %485 = vmatprep.subr.mxu0 0.0
    %486 = vmatpush1.msra.mxu0 0.0
    %487 = vmatprep.subr.mxu0 0.0
    %488 = vmatpush1.msra.mxu0 0.0
    %489 = vmatprep.subr.mxu0 0.0
    %490 = vmatpush1.msra.mxu0 0.0
    %491 = vmatprep.subr.mxu0 0.0
    %492 = vmatpush1.msra.mxu0 0.0
    %493 = vmatprep.subr.mxu0 0.0
    %494 = vmatpush1.msra.mxu0 0.0
    %495 = vmatprep.subr.mxu0 0.0
    %496 = vmatpush1.msra.mxu0 0.0
    %497 = vmatprep.subr.mxu0 0.0
    %498 = vmatpush1.msra.mxu0 0.0
    %499 = vmatprep.subr.mxu0 0.0
    %500 = vmatpush1.msra.mxu0 0.0
    %501 = vmatprep.subr.mxu0 0.0
    %502 = vmatpush1.msra.mxu0 0.0
    %503 = vmatprep.subr.mxu0 0.0
    %504 = vmatpush1.msra.mxu0 0.0
    %505 = vmatprep.subr.mxu0 0.0
    %506 = vmatpush1.msra.mxu0 0.0
    %507 = vmatprep.subr.mxu0 %v479
    %508 = vmatpush1.msra.mxu0 %v478
    %509 = vmatprep.subr.mxu0 %v477
    %510 = vmatpush1.msra.mxu0 %v476
    %511 = vmatprep.subr.mxu0 %v475
    %512 = vmatpush1.msra.mxu0 %v474
    %513 = vmatprep.subr.mxu0 %v473
    %514 = vmatpush1.msra.mxu0 %v472
    %515 = vmatprep.subr.mxu0 0.0
    %516 = vmatpush2.msra.mxu0 0.0
    %517 = vmatprep.subr.mxu0 0.0
    %518 = vmatpush2.msra.mxu0 0.0
    %519 = vmatprep.subr.mxu0 0.0
    %520 = vmatpush2.msra.mxu0 0.0
    %521 = vmatprep.subr.mxu0 0.0
    %522 = vmatpush2.msra.mxu0 0.0
    %523 = vmatprep.subr.mxu0 0.0
    %524 = vmatpush2.msra.mxu0 0.0
    %525 = vmatprep.subr.mxu0 0.0
    %526 = vmatpush2.msra.mxu0 0.0
    %527 = vmatprep.subr.mxu0 0.0
    %528 = vmatpush2.msra.mxu0 0.0
    %529 = vmatprep.subr.mxu0 0.0
    %530 = vmatpush2.msra.mxu0 0.0
    %531 = vmatprep.subr.mxu0 0.0
    %532 = vmatpush2.msra.mxu0 0.0
    %533 = vmatprep.subr.mxu0 0.0
    %534 = vmatpush2.msra.mxu0 0.0
    %535 = vmatprep.subr.mxu0 0.0
    %536 = vmatpush2.msra.mxu0 0.0
    %537 = vmatprep.subr.mxu0 0.0
    %538 = vmatpush2.msra.mxu0 0.0
    %539 = vmatprep.subr.mxu0 0.0
    %540 = vmatpush2.msra.mxu0 0.0
    %541 = vmatprep.subr.mxu0 0.0
    %542 = vmatpush2.msra.mxu0 0.0
    %543 = vmatprep.subr.mxu0 0.0
    %544 = vmatpush2.msra.mxu0 0.0
    %545 = vmatprep.subr.mxu0 0.0
    %546 = vmatpush2.msra.mxu0 0.0
    %547 = vmatprep.mubr.f32.mxu0 0.0
    %548 = vmatmul.mubr.f32.gmra.mxu0 %v481
    %v549 = vpop.f32.mrf.mxu0
    %v550 = vadd.f32 0.0, %v549
    %v551 = vpop.f32.mrf.mxu0
    %552 = vdwg.mxu0
    %v554 = vcombine.high %v550, %v550
    %v556 = vunpack.c.l.s4 1966171168
    %v557 = vunpack.c.0.s8 %v556
    %v558 = vlaneseq
    %v559 = vshrl.u32 %v558, 7
    %v560 = vsub.s32 %v557, %v559
    %v561 = vrot.slane %v550, %v560
    %v563 = vunpack.c.l.s4 1966171168
    %v564 = vunpack.c.0.s8 %v563
    %v565 = vlaneseq
    %v566 = vshrl.u32 %v565, 7
    %v567 = vsub.s32 %v564, %v566
    %v568 = vrot.slane %v554, %v567
    %v569 = vcombine.high %v561, %v561
    %v570 = vcombine.high %v568, %v568
    %v572 = vunpack.c.l.s4 1966171168
    %v573 = vunpack.c.0.s8 %v572
    %v574 = vlaneseq
    %v575 = vshrl.u32 %v574, 7
    %v576 = vsub.s32 %v573, %v575
    %v577 = vrot.slane %v561, %v576
    %v579 = vunpack.c.l.s4 1966171168
    %v580 = vunpack.c.0.s8 %v579
    %v581 = vlaneseq
    %v582 = vshrl.u32 %v581, 7
    %v583 = vsub.s32 %v580, %v582
    %v584 = vrot.slane %v568, %v583
    %v586 = vunpack.c.l.s4 1966171168
    %v587 = vunpack.c.0.s8 %v586
    %v588 = vlaneseq
    %v589 = vshrl.u32 %v588, 7
    %v590 = vsub.s32 %v587, %v589
    %v591 = vrot.slane %v569, %v590
    %v593 = vunpack.c.l.s4 1966171168
    %v594 = vunpack.c.0.s8 %v593
    %v595 = vlaneseq
    %v596 = vshrl.u32 %v595, 7
    %v597 = vsub.s32 %v594, %v596
    %v598 = vrot.slane %v570, %v597
    %v599 = vcombine.high %v577, %v577
    %v600 = vcombine.high %v584, %v584
    %v601 = vcombine.high %v591, %v591
    %v602 = vcombine.high %v598, %v598
    %v603 = vlaneseq
    %v604 = vshrl.u32 %v603, 7
    %v605 = vsub.s32 0, %v604
    %v606 = vrot.slane %v577, %v605
    %v607 = vlaneseq
    %v608 = vshrl.u32 %v607, 7
    %v609 = vsub.s32 0, %v608
    %v610 = vrot.slane %v591, %v609
    %v611 = vlaneseq
    %v612 = vshrl.u32 %v611, 7
    %v613 = vsub.s32 0, %v612
    %v614 = vrot.slane %v599, %v613
    %v615 = vlaneseq
    %v616 = vshrl.u32 %v615, 7
    %v617 = vsub.s32 0, %v616
    %v618 = vrot.slane %v601, %v617
    %v619 = vlaneseq
    %v620 = vshrl.u32 %v619, 7
    %v621 = vsub.s32 0, %v620
    %v622 = vrot.slane %v584, %v621
    %v623 = vlaneseq
    %v624 = vshrl.u32 %v623, 7
    %v625 = vsub.s32 0, %v624
    %v626 = vrot.slane %v598, %v625
    %v627 = vlaneseq
    %v628 = vshrl.u32 %v627, 7
    %v629 = vsub.s32 0, %v628
    %v630 = vrot.slane %v600, %v629
    %v631 = vlaneseq
    %v632 = vshrl.u32 %v631, 7
    %v633 = vsub.s32 0, %v632
    %v634 = vrot.slane %v602, %v633
    %v643 = vmul.f32 %v71, %v606
    %v644 = vmul.f32 %v72, %v610
    %v645 = vmul.f32 %v73, %v614
    %v646 = vmul.f32 %v74, %v618
    %v647 = vmul.f32 %v75, %v622
    %v648 = vmul.f32 %v76, %v626
    %v649 = vmul.f32 %v77, %v630
    %v650 = vmul.f32 %v78, %v634
    %v651 = vsel %vm306, %v643, 0.0
    %652 = vadd.xlane.f32.xlu0 %v651
    %v653 = vpop.xlane.xlu0 %652
    %v654 = vsel %vm306, %v644, 0.0
    %655 = vadd.xlane.f32.xlu0 %v654
    %v656 = vpop.xlane.xlu0 %655
    %v657 = vsel %vm306, %v645, 0.0
    %658 = vadd.xlane.f32.xlu0 %v657
    %v659 = vpop.xlane.xlu0 %658
    %v660 = vsel %vm306, %v646, 0.0
    %661 = vadd.xlane.f32.xlu0 %v660
    %v662 = vpop.xlane.xlu0 %661
    %v663 = vsel %vm306, %v647, 0.0
    %664 = vadd.xlane.f32.xlu0 %v663
    %v665 = vpop.xlane.xlu0 %664
    %v666 = vsel %vm306, %v648, 0.0
    %667 = vadd.xlane.f32.xlu0 %v666
    %v668 = vpop.xlane.xlu0 %667
    %v669 = vsel %vm306, %v649, 0.0
    %670 = vadd.xlane.f32.xlu0 %v669
    %v671 = vpop.xlane.xlu0 %670
    %v672 = vsel %vm306, %v650, 0.0
    %673 = vadd.xlane.f32.xlu0 %v672
    %v674 = vpop.xlane.xlu0 %673
    %vm675 = vcmp.gt.s32.totalorder %v69, 0
    %v684 = vadd.s32 %v82, 4294967288
    %v685 = vlaneseq
    %v686 = vshrl.u32 %v685, 7
    %v687 = vsub.s32 %v684, %v686
    %v688 = vrot.slane %v653, %v687
    %v689 = vlaneseq
    %v690 = vshrl.u32 %v689, 7
    %v691 = vsub.s32 %v684, %v690
    %v692 = vrot.slane %v656, %v691
    %v693 = vlaneseq
    %v694 = vshrl.u32 %v693, 7
    %v695 = vsub.s32 %v684, %v694
    %v696 = vrot.slane %v659, %v695
    %v697 = vlaneseq
    %v698 = vshrl.u32 %v697, 7
    %v699 = vsub.s32 %v684, %v698
    %v700 = vrot.slane %v662, %v699
    %v701 = vlaneseq
    %v702 = vshrl.u32 %v701, 7
    %v703 = vsub.s32 %v684, %v702
    %v704 = vrot.slane %v665, %v703
    %v705 = vlaneseq
    %v706 = vshrl.u32 %v705, 7
    %v707 = vsub.s32 %v684, %v706
    %v708 = vrot.slane %v668, %v707
    %v709 = vlaneseq
    %v710 = vshrl.u32 %v709, 7
    %v711 = vsub.s32 %v684, %v710
    %v712 = vrot.slane %v671, %v711
    %v713 = vlaneseq
    %v714 = vshrl.u32 %v713, 7
    %v715 = vsub.s32 %v684, %v714
    %v716 = vrot.slane %v674, %v715
    %vm717 = vcmask 1041409
    %v718 = vsel %vm717, %v692, %v688
    %vm719 = vcmask 1042434
    %v720 = vsel %vm719, %v696, %v718
    %vm721 = vcmask 1043459
    %v722 = vsel %vm721, %v700, %v720
    %vm723 = vcmask 1044484
    %v724 = vsel %vm723, %v704, %v722
    %vm725 = vcmask 1045509
    %v726 = vsel %vm725, %v708, %v724
    %vm727 = vcmask 1046534
    %v728 = vsel %vm727, %v712, %v726
    %vm729 = vcmask 1047559
    %v730 = vsel %vm729, %v716, %v728
    %v732 = vsel %vm675, -1e+30, %v730
    %vm733 = vcmask 130112
    %v734 = vsel %vm733, %v732, -inf
    %735 = vmax.xlane.f32.xlu0 %v734
    %v736 = vpop.xlane.xlu0 %735
    %v737 = vsub.f32 %v732, %v736
    %v738 = vmul.f32 %v737, 1.442695
    %v739 = vpow.pop %v738
    %741 = vrot.lane.b32.xlu0 %v739, 120
    %v742 = vpop.permute.xlu0 %741
    %vm744 = vcmask 64512
    %v745 = vsel %vm744, %v742, 0.0
    %746 = vadd.xlane.f32.xlu0 %v745
    %v747 = vpop.xlane.xlu0 %746
    %v748 = vrcp.pop %v747
    %v749 = vmul.f32 %v739, %v748
    %v750 = vlaneseq
    %v751 = vshrl.u32 %v750, 7
    %v752 = vsub.s32 0, %v751
    %v753 = vrot.slane %v749, %v752
    %s755 = sor.u32 256, 8
    %756 = vbcast.lane.b32.xlu0 %v753, %s755
    %v757 = vpop.permute.xlu0 %756
    %v758 = vlaneseq
    %v759 = vshrl.u32 %v758, 7
    %v760 = vsub.s32 1, %v759
    %v761 = vrot.slane %v749, %v760
    %s763 = sor.u32 256, 8
    %764 = vbcast.lane.b32.xlu0 %v761, %s763
    %v765 = vpop.permute.xlu0 %764
    %v766 = vlaneseq
    %v767 = vshrl.u32 %v766, 7
    %v768 = vsub.s32 2, %v767
    %v769 = vrot.slane %v749, %v768
    %s771 = sor.u32 256, 8
    %772 = vbcast.lane.b32.xlu0 %v769, %s771
    %v773 = vpop.permute.xlu0 %772
    %v774 = vlaneseq
    %v775 = vshrl.u32 %v774, 7
    %v776 = vsub.s32 3, %v775
    %v777 = vrot.slane %v749, %v776
    %s779 = sor.u32 256, 8
    %780 = vbcast.lane.b32.xlu0 %v777, %s779
    %v781 = vpop.permute.xlu0 %780
    %v782 = vlaneseq
    %v783 = vshrl.u32 %v782, 7
    %v784 = vsub.s32 4, %v783
    %v785 = vrot.slane %v749, %v784
    %s787 = sor.u32 256, 8
    %788 = vbcast.lane.b32.xlu0 %v785, %s787
    %v789 = vpop.permute.xlu0 %788
    %v790 = vlaneseq
    %v791 = vshrl.u32 %v790, 7
    %v792 = vsub.s32 5, %v791
    %v793 = vrot.slane %v749, %v792
    %s795 = sor.u32 256, 8
    %796 = vbcast.lane.b32.xlu0 %v793, %s795
    %v797 = vpop.permute.xlu0 %796
    %v798 = vlaneseq
    %v799 = vshrl.u32 %v798, 7
    %v800 = vsub.s32 6, %v799
    %v801 = vrot.slane %v749, %v800
    %s803 = sor.u32 256, 8
    %804 = vbcast.lane.b32.xlu0 %v801, %s803
    %v805 = vpop.permute.xlu0 %804
    %v806 = vlaneseq
    %v807 = vshrl.u32 %v806, 7
    %v808 = vsub.s32 7, %v807
    %v809 = vrot.slane %v749, %v808
    %s811 = sor.u32 256, 8
    %812 = vbcast.lane.b32.xlu0 %v809, %s811
    %v813 = vpop.permute.xlu0 %812
    %v814 = vmul.f32 %v757, %v71
    %v815 = vmul.f32 %v765, %v72
    %v816 = vmul.f32 %v773, %v73
    %v817 = vmul.f32 %v781, %v74
    %v818 = vmul.f32 %v789, %v75
    %v819 = vmul.f32 %v797, %v76
    %v820 = vmul.f32 %v805, %v77
    %v821 = vmul.f32 %v813, %v78
    %v822 = vsel %vm306, %v814, 0.0
    %v823 = vrot.slane %v822, 4
    %v824 = vadd.f32 %v822, %v823
    %v825 = vrot.slane %v824, 2
    %v826 = vadd.f32 %v824, %v825
    %v827 = vrot.slane %v826, 1
    %v828 = vadd.f32 %v826, %v827
    %v829 = vsel %vm306, %v815, 0.0
    %v830 = vrot.slane %v829, 4
    %v831 = vadd.f32 %v829, %v830
    %v832 = vrot.slane %v831, 2
    %v833 = vadd.f32 %v831, %v832
    %v834 = vrot.slane %v833, 1
    %v835 = vadd.f32 %v833, %v834
    %v836 = vsel %vm306, %v816, 0.0
    %v837 = vrot.slane %v836, 4
    %v838 = vadd.f32 %v836, %v837
    %v839 = vrot.slane %v838, 2
    %v840 = vadd.f32 %v838, %v839
    %v841 = vrot.slane %v840, 1
    %v842 = vadd.f32 %v840, %v841
    %v843 = vsel %vm306, %v817, 0.0
    %v844 = vrot.slane %v843, 4
    %v845 = vadd.f32 %v843, %v844
    %v846 = vrot.slane %v845, 2
    %v847 = vadd.f32 %v845, %v846
    %v848 = vrot.slane %v847, 1
    %v849 = vadd.f32 %v847, %v848
    %v850 = vsel %vm306, %v818, 0.0
    %v851 = vrot.slane %v850, 4
    %v852 = vadd.f32 %v850, %v851
    %v853 = vrot.slane %v852, 2
    %v854 = vadd.f32 %v852, %v853
    %v855 = vrot.slane %v854, 1
    %v856 = vadd.f32 %v854, %v855
    %v857 = vsel %vm306, %v819, 0.0
    %v858 = vrot.slane %v857, 4
    %v859 = vadd.f32 %v857, %v858
    %v860 = vrot.slane %v859, 2
    %v861 = vadd.f32 %v859, %v860
    %v862 = vrot.slane %v861, 1
    %v863 = vadd.f32 %v861, %v862
    %v864 = vsel %vm306, %v820, 0.0
    %v865 = vrot.slane %v864, 4
    %v866 = vadd.f32 %v864, %v865
    %v867 = vrot.slane %v866, 2
    %v868 = vadd.f32 %v866, %v867
    %v869 = vrot.slane %v868, 1
    %v870 = vadd.f32 %v868, %v869
    %v871 = vsel %vm306, %v821, 0.0
    %v872 = vrot.slane %v871, 4
    %v873 = vadd.f32 %v871, %v872
    %v874 = vrot.slane %v873, 2
    %v875 = vadd.f32 %v873, %v874
    %v876 = vrot.slane %v875, 1
    %v877 = vadd.f32 %v875, %v876
    %v878 = vld [vmem:[#allocation8 + $0x1b0] sm:$0xff]
    %v879 = vld [vmem:[#allocation8 + $0x1b8] sm:$0xff]
    %v880 = vld [vmem:[#allocation8 + $0x1c8] sm:$0xff]
    %v881 = vld [vmem:[#allocation8 + $0x1d0] sm:$0xff]
    %v882 = vld [vmem:[#allocation8 + $0x1e0] sm:$0xff]
    %v883 = vld [vmem:[#allocation8 + $0x1e8] sm:$0xff]
    %v884 = vld [vmem:[#allocation8 + $0x1f8] sm:$0xff]
    %v885 = vld [vmem:[#allocation8 + $0x200] sm:$0xff]
    %v886 = vld [vmem:[#allocation8 + $0x210] sm:$0xff]
    %v887 = vld [vmem:[#allocation8 + $0x218] sm:$0xff]
    %v888 = vld [vmem:[#allocation8 + $0x228] sm:$0xff]
    %v889 = vld [vmem:[#allocation8 + $0x230] sm:$0xff]
    %v890 = vld [vmem:[#allocation8 + $0x240] sm:$0xff]
    %v891 = vld [vmem:[#allocation8 + $0x248] sm:$0xff]
    %v892 = vld [vmem:[#allocation8 + $0x258] sm:$0xff]
    %v893 = vld [vmem:[#allocation8 + $0x260] sm:$0xff]
    %894 = vmatprep.subr.mxu0 0.0
    %895 = vmatpush1.msra.mxu0 0.0
    %896 = vmatprep.subr.mxu0 0.0
    %897 = vmatpush1.msra.mxu0 0.0
    %898 = vmatprep.subr.mxu0 0.0
    %899 = vmatpush1.msra.mxu0 0.0
    %900 = vmatprep.subr.mxu0 0.0
    %901 = vmatpush1.msra.mxu0 0.0
    %902 = vmatprep.subr.mxu0 0.0
    %903 = vmatpush1.msra.mxu0 0.0
    %904 = vmatprep.subr.mxu0 0.0
    %905 = vmatpush1.msra.mxu0 0.0
    %906 = vmatprep.subr.mxu0 0.0
    %907 = vmatpush1.msra.mxu0 0.0
    %908 = vmatprep.subr.mxu0 0.0
    %909 = vmatpush1.msra.mxu0 0.0
    %910 = vmatprep.subr.mxu0 0.0
    %911 = vmatpush1.msra.mxu0 0.0
    %912 = vmatprep.subr.mxu0 0.0
    %913 = vmatpush1.msra.mxu0 0.0
    %914 = vmatprep.subr.mxu0 0.0
    %915 = vmatpush1.msra.mxu0 0.0
    %916 = vmatprep.subr.mxu0 0.0
    %917 = vmatpush1.msra.mxu0 0.0
    %918 = vmatprep.subr.mxu0 %v893
    %919 = vmatpush1.msra.mxu0 %v892
    %920 = vmatprep.subr.mxu0 %v891
    %921 = vmatpush1.msra.mxu0 %v890
    %922 = vmatprep.subr.mxu0 %v889
    %923 = vmatpush1.msra.mxu0 %v888
    %924 = vmatprep.subr.mxu0 %v887
    %925 = vmatpush1.msra.mxu0 %v886
    %926 = vmatprep.subr.mxu0 0.0
    %927 = vmatpush2.msra.mxu0 0.0
    %928 = vmatprep.subr.mxu0 0.0
    %929 = vmatpush2.msra.mxu0 0.0
    %930 = vmatprep.subr.mxu0 0.0
    %931 = vmatpush2.msra.mxu0 0.0
    %932 = vmatprep.subr.mxu0 0.0
    %933 = vmatpush2.msra.mxu0 0.0
    %934 = vmatprep.subr.mxu0 0.0
    %935 = vmatpush2.msra.mxu0 0.0
    %936 = vmatprep.subr.mxu0 0.0
    %937 = vmatpush2.msra.mxu0 0.0
    %938 = vmatprep.subr.mxu0 0.0
    %939 = vmatpush2.msra.mxu0 0.0
    %940 = vmatprep.subr.mxu0 0.0
    %941 = vmatpush2.msra.mxu0 0.0
    %942 = vmatprep.subr.mxu0 0.0
    %943 = vmatpush2.msra.mxu0 0.0
    %944 = vmatprep.subr.mxu0 0.0
    %945 = vmatpush2.msra.mxu0 0.0
    %946 = vmatprep.subr.mxu0 0.0
    %947 = vmatpush2.msra.mxu0 0.0
    %948 = vmatprep.subr.mxu0 0.0
    %949 = vmatpush2.msra.mxu0 0.0
    %950 = vmatprep.subr.mxu0 0.0
    %951 = vmatpush2.msra.mxu0 0.0
    %952 = vmatprep.subr.mxu0 0.0
    %953 = vmatpush2.msra.mxu0 0.0
    %954 = vmatprep.subr.mxu0 0.0
    %955 = vmatpush2.msra.mxu0 0.0
    %956 = vmatprep.subr.mxu0 0.0
    %957 = vmatpush2.msra.mxu0 0.0
    %958 = vmatprep.mubr.f32.mxu0 0.0
    %959 = vmatmul.mubr.f32.gmra.mxu0 %v481
    %v960 = vpop.f32.mrf.mxu0
    %v961 = vadd.f32 0.0, %v960
    %v962 = vpop.f32.mrf.mxu0
    %963 = vdwg.mxu0
    %v972 = vsel %vm717, %v835, %v828
    %v973 = vsel %vm719, %v842, %v972
    %v974 = vsel %vm721, %v849, %v973
    %v975 = vsel %vm723, %v856, %v974
    %v976 = vsel %vm725, %v863, %v975
    %v977 = vsel %vm727, %v870, %v976
    %v978 = vsel %vm729, %v877, %v977
    %v979 = vsel %vm306, %v978, 0
    %981 = vmatprep.subr.mxu0 0.0
    %982 = vmatpush1.msra.mxu0 0.0
    %983 = vmatprep.subr.mxu0 0.0
    %984 = vmatpush1.msra.mxu0 0.0
    %985 = vmatprep.subr.mxu0 0.0
    %986 = vmatpush1.msra.mxu0 0.0
    %987 = vmatprep.subr.mxu0 0.0
    %988 = vmatpush1.msra.mxu0 0.0
    %989 = vmatprep.subr.mxu0 0.0
    %990 = vmatpush1.msra.mxu0 0.0
    %991 = vmatprep.subr.mxu0 0.0
    %992 = vmatpush1.msra.mxu0 0.0
    %993 = vmatprep.subr.mxu0 0.0
    %994 = vmatpush1.msra.mxu0 0.0
    %995 = vmatprep.subr.mxu0 0.0
    %996 = vmatpush1.msra.mxu0 0.0
    %997 = vmatprep.subr.mxu0 0.0
    %998 = vmatpush1.msra.mxu0 0.0
    %999 = vmatprep.subr.mxu0 0.0
    %1000 = vmatpush1.msra.mxu0 0.0
    %1001 = vmatprep.subr.mxu0 0.0
    %1002 = vmatpush1.msra.mxu0 0.0
    %1003 = vmatprep.subr.mxu0 0.0
    %1004 = vmatpush1.msra.mxu0 0.0
    %1005 = vmatprep.subr.mxu0 %v885
    %1006 = vmatpush1.msra.mxu0 %v884
    %1007 = vmatprep.subr.mxu0 %v883
    %1008 = vmatpush1.msra.mxu0 %v882
    %1009 = vmatprep.subr.mxu0 %v881
    %1010 = vmatpush1.msra.mxu0 %v880
    %1011 = vmatprep.subr.mxu0 %v879
    %1012 = vmatpush1.msra.mxu0 %v878
    %1013 = vmatprep.subr.mxu0 0.0
    %1014 = vmatpush2.msra.mxu0 0.0
    %1015 = vmatprep.subr.mxu0 0.0
    %1016 = vmatpush2.msra.mxu0 0.0
    %1017 = vmatprep.subr.mxu0 0.0
    %1018 = vmatpush2.msra.mxu0 0.0
    %1019 = vmatprep.subr.mxu0 0.0
    %1020 = vmatpush2.msra.mxu0 0.0
    %1021 = vmatprep.subr.mxu0 0.0
    %1022 = vmatpush2.msra.mxu0 0.0
    %1023 = vmatprep.subr.mxu0 0.0
    %1024 = vmatpush2.msra.mxu0 0.0
    %1025 = vmatprep.subr.mxu0 0.0
    %1026 = vmatpush2.msra.mxu0 0.0
    %1027 = vmatprep.subr.mxu0 0.0
    %1028 = vmatpush2.msra.mxu0 0.0
    %1029 = vmatprep.subr.mxu0 0.0
    %1030 = vmatpush2.msra.mxu0 0.0
    %1031 = vmatprep.subr.mxu0 0.0
    %1032 = vmatpush2.msra.mxu0 0.0
    %1033 = vmatprep.subr.mxu0 0.0
    %1034 = vmatpush2.msra.mxu0 0.0
    %1035 = vmatprep.subr.mxu0 0.0
    %1036 = vmatpush2.msra.mxu0 0.0
    %1037 = vmatprep.subr.mxu0 0.0
    %1038 = vmatpush2.msra.mxu0 0.0
    %1039 = vmatprep.subr.mxu0 0.0
    %1040 = vmatpush2.msra.mxu0 0.0
    %1041 = vmatprep.subr.mxu0 0.0
    %1042 = vmatpush2.msra.mxu0 0.0
    %1043 = vmatprep.subr.mxu0 0.0
    %1044 = vmatpush2.msra.mxu0 0.0
    %1045 = vmatprep.mubr.f32.mxu0 0.0
    %1046 = vmatmul.mubr.f32.gmra.mxu0 %v979
    %v1047 = vpop.f32.mrf.mxu0
    %v1048 = vadd.f32 %v961, %v1047
    %v1049 = vpop.f32.mrf.mxu0
    %1050 = vdwg.mxu0
    %s1051 = scalar_lea.vmem [#allocation8], 624
    %v1052 = vld [vmem:[%s1051] ss:$8 sm:$0x7]
    %v1054 = vlaneseq
    %v1055 = vshrl.u32 %v1054, 7
    %v1056 = vsub.s32 0, %v1055
    %v1057 = vrot.slane %v1052, %v1056
    %v1059 = vadd.f32 %v1048, %v1057
    %v1060 = vtanh.pop %v1059
    %v1061 = vld [vmem:[#allocation8 + $0x288] sm:$0xff]
    %v1062 = vld [vmem:[#allocation8 + $0x290] sm:$0xff]
    %v1063 = vld [vmem:[#allocation8 + $0x2a0] sm:$0xff]
    %v1064 = vld [vmem:[#allocation8 + $0x2a8] sm:$0xff]
    %v1065 = vld [vmem:[#allocation8 + $0x2b8] sm:$0xff]
    %v1066 = vld [vmem:[#allocation8 + $0x2c0] sm:$0xff]
    %v1067 = vld [vmem:[#allocation8 + $0x2d0] sm:$0xff]
    %v1068 = vld [vmem:[#allocation8 + $0x2d8] sm:$0xff]
    %v1070 = vsel %vm306, %v1060, 0
    %1072 = vmatprep.subr.mxu0 0.0
    %1073 = vmatpush1.msra.mxu0 0.0
    %1074 = vmatprep.subr.mxu0 0.0
    %1075 = vmatpush1.msra.mxu0 0.0
    %1076 = vmatprep.subr.mxu0 0.0
    %1077 = vmatpush1.msra.mxu0 0.0
    %1078 = vmatprep.subr.mxu0 0.0
    %1079 = vmatpush1.msra.mxu0 0.0
    %1080 = vmatprep.subr.mxu0 0.0
    %1081 = vmatpush1.msra.mxu0 0.0
    %1082 = vmatprep.subr.mxu0 0.0
    %1083 = vmatpush1.msra.mxu0 0.0
    %1084 = vmatprep.subr.mxu0 0.0
    %1085 = vmatpush1.msra.mxu0 0.0
    %1086 = vmatprep.subr.mxu0 0.0
    %1087 = vmatpush1.msra.mxu0 0.0
    %1088 = vmatprep.subr.mxu0 0.0
    %1089 = vmatpush1.msra.mxu0 0.0
    %1090 = vmatprep.subr.mxu0 0.0
    %1091 = vmatpush1.msra.mxu0 0.0
    %1092 = vmatprep.subr.mxu0 0.0
    %1093 = vmatpush1.msra.mxu0 0.0
    %1094 = vmatprep.subr.mxu0 0.0
    %1095 = vmatpush1.msra.mxu0 0.0
    %1096 = vmatprep.subr.mxu0 %v1068
    %1097 = vmatpush1.msra.mxu0 %v1067
    %1098 = vmatprep.subr.mxu0 %v1066
    %1099 = vmatpush1.msra.mxu0 %v1065
    %1100 = vmatprep.subr.mxu0 %v1064
    %1101 = vmatpush1.msra.mxu0 %v1063
    %1102 = vmatprep.subr.mxu0 %v1062
    %1103 = vmatpush1.msra.mxu0 %v1061
    %1104 = vmatprep.subr.mxu0 0.0
    %1105 = vmatpush2.msra.mxu0 0.0
    %1106 = vmatprep.subr.mxu0 0.0
    %1107 = vmatpush2.msra.mxu0 0.0
    %1108 = vmatprep.subr.mxu0 0.0
    %1109 = vmatpush2.msra.mxu0 0.0
    %1110 = vmatprep.subr.mxu0 0.0
    %1111 = vmatpush2.msra.mxu0 0.0
    %1112 = vmatprep.subr.mxu0 0.0
    %1113 = vmatpush2.msra.mxu0 0.0
    %1114 = vmatprep.subr.mxu0 0.0
    %1115 = vmatpush2.msra.mxu0 0.0
    %1116 = vmatprep.subr.mxu0 0.0
    %1117 = vmatpush2.msra.mxu0 0.0
    %1118 = vmatprep.subr.mxu0 0.0
    %1119 = vmatpush2.msra.mxu0 0.0
    %1120 = vmatprep.subr.mxu0 0.0
    %1121 = vmatpush2.msra.mxu0 0.0
    %1122 = vmatprep.subr.mxu0 0.0
    %1123 = vmatpush2.msra.mxu0 0.0
    %1124 = vmatprep.subr.mxu0 0.0
    %1125 = vmatpush2.msra.mxu0 0.0
    %1126 = vmatprep.subr.mxu0 0.0
    %1127 = vmatpush2.msra.mxu0 0.0
    %1128 = vmatprep.subr.mxu0 0.0
    %1129 = vmatpush2.msra.mxu0 0.0
    %1130 = vmatprep.subr.mxu0 0.0
    %1131 = vmatpush2.msra.mxu0 0.0
    %1132 = vmatprep.subr.mxu0 0.0
    %1133 = vmatpush2.msra.mxu0 0.0
    %1134 = vmatprep.subr.mxu0 0.0
    %1135 = vmatpush2.msra.mxu0 0.0
    %1136 = vmatprep.mubr.f32.mxu0 0.0
    %1137 = vmatmul.mubr.f32.gmra.mxu0 %v1070
    %v1138 = vpop.f32.mrf.mxu0
    %v1139 = vadd.f32 0.0, %v1138
    %v1140 = vpop.f32.mrf.mxu0
    %1141 = vdwg.mxu0
    %vm1142 = vcmp.lt.s32.totalorder %v82, 64
    %v1143 = vmul.f32 %v1139, 1.442695
    %v1144 = vpow.pop %v1143
    %v1145 = vsel %vm1142, %v1144, 1e-10
    %v1146 = vld [vmem:[#allocation8 + $0x2e8] sm:$0xff]
    %v1147 = vld [vmem:[#allocation8 + $0x2f0] sm:$0xff]
    %v1148 = vld [vmem:[#allocation8 + $0x300] sm:$0xff]
    %v1149 = vld [vmem:[#allocation8 + $0x308] sm:$0xff]
    %v1150 = vld [vmem:[#allocation8 + $0x318] sm:$0xff]
    %v1151 = vld [vmem:[#allocation8 + $0x320] sm:$0xff]
    %v1152 = vld [vmem:[#allocation8 + $0x330] sm:$0xff]
    %v1153 = vld [vmem:[#allocation8 + $0x338] sm:$0xff]
    %v1155 = vsel %vm306, %v71, 0
    %v1158 = vsel %vm306, %v72, 0
    %v1161 = vsel %vm306, %v73, 0
    %v1164 = vsel %vm306, %v74, 0
    %v1167 = vsel %vm306, %v75, 0
    %v1170 = vsel %vm306, %v76, 0
    %v1173 = vsel %vm306, %v77, 0
    %v1176 = vsel %vm306, %v78, 0
    %1178 = vmatprep.subr.mxu0 0.0
    %1179 = vmatpush1.msra.mxu0 0.0
    %1180 = vmatprep.subr.mxu0 0.0
    %1181 = vmatpush1.msra.mxu0 0.0
    %1182 = vmatprep.subr.mxu0 0.0
    %1183 = vmatpush1.msra.mxu0 0.0
    %1184 = vmatprep.subr.mxu0 0.0
    %1185 = vmatpush1.msra.mxu0 0.0
    %1186 = vmatprep.subr.mxu0 0.0
    %1187 = vmatpush1.msra.mxu0 0.0
    %1188 = vmatprep.subr.mxu0 0.0
    %1189 = vmatpush1.msra.mxu0 0.0
    %1190 = vmatprep.subr.mxu0 0.0
    %1191 = vmatpush1.msra.mxu0 0.0
    %1192 = vmatprep.subr.mxu0 0.0
    %1193 = vmatpush1.msra.mxu0 0.0
    %1194 = vmatprep.subr.mxu0 0.0
    %1195 = vmatpush1.msra.mxu0 0.0
    %1196 = vmatprep.subr.mxu0 0.0
    %1197 = vmatpush1.msra.mxu0 0.0
    %1198 = vmatprep.subr.mxu0 0.0
    %1199 = vmatpush1.msra.mxu0 0.0
    %1200 = vmatprep.subr.mxu0 0.0
    %1201 = vmatpush1.msra.mxu0 0.0
    %1202 = vmatprep.subr.mxu0 %v1153
    %1203 = vmatpush1.msra.mxu0 %v1152
    %1204 = vmatprep.subr.mxu0 %v1151
    %1205 = vmatpush1.msra.mxu0 %v1150
    %1206 = vmatprep.subr.mxu0 %v1149
    %1207 = vmatpush1.msra.mxu0 %v1148
    %1208 = vmatprep.subr.mxu0 %v1147
    %1209 = vmatpush1.msra.mxu0 %v1146
    %1210 = vmatprep.subr.mxu0 0.0
    %1211 = vmatpush2.msra.mxu0 0.0
    %1212 = vmatprep.subr.mxu0 0.0
    %1213 = vmatpush2.msra.mxu0 0.0
    %1214 = vmatprep.subr.mxu0 0.0
    %1215 = vmatpush2.msra.mxu0 0.0
    %1216 = vmatprep.subr.mxu0 0.0
    %1217 = vmatpush2.msra.mxu0 0.0
    %1218 = vmatprep.subr.mxu0 0.0
    %1219 = vmatpush2.msra.mxu0 0.0
    %1220 = vmatprep.subr.mxu0 0.0
    %1221 = vmatpush2.msra.mxu0 0.0
    %1222 = vmatprep.subr.mxu0 0.0
    %1223 = vmatpush2.msra.mxu0 0.0
    %1224 = vmatprep.subr.mxu0 0.0
    %1225 = vmatpush2.msra.mxu0 0.0
    %1226 = vmatprep.subr.mxu0 0.0
    %1227 = vmatpush2.msra.mxu0 0.0
    %1228 = vmatprep.subr.mxu0 0.0
    %1229 = vmatpush2.msra.mxu0 0.0
    %1230 = vmatprep.subr.mxu0 0.0
    %1231 = vmatpush2.msra.mxu0 0.0
    %1232 = vmatprep.subr.mxu0 0.0
    %1233 = vmatpush2.msra.mxu0 0.0
    %1234 = vmatprep.subr.mxu0 0.0
    %1235 = vmatpush2.msra.mxu0 0.0
    %1236 = vmatprep.subr.mxu0 0.0
    %1237 = vmatpush2.msra.mxu0 0.0
    %1238 = vmatprep.subr.mxu0 0.0
    %1239 = vmatpush2.msra.mxu0 0.0
    %1240 = vmatprep.subr.mxu0 0.0
    %1241 = vmatpush2.msra.mxu0 0.0
    %1242 = vmatprep.mubr.f32.mxu0 0.0
    %1243 = vmatmul.mubr.f32.gmra.mxu0 %v1155
    %v1244 = vpop.f32.mrf.mxu0
    %v1245 = vadd.f32 0.0, %v1244
    %v1246 = vpop.f32.mrf.mxu0
    %1247 = vmatprep.mubr.f32.mxu0 0.0
    %1248 = vmatmul.mubr.f32.gmra.mxu0 %v1158
    %v1249 = vpop.f32.mrf.mxu0
    %v1250 = vadd.f32 0.0, %v1249
    %v1251 = vpop.f32.mrf.mxu0
    %1252 = vmatprep.mubr.f32.mxu0 0.0
    %1253 = vmatmul.mubr.f32.gmra.mxu0 %v1161
    %v1254 = vpop.f32.mrf.mxu0
    %v1255 = vadd.f32 0.0, %v1254
    %v1256 = vpop.f32.mrf.mxu0
    %1257 = vmatprep.mubr.f32.mxu0 0.0
    %1258 = vmatmul.mubr.f32.gmra.mxu0 %v1164
    %v1259 = vpop.f32.mrf.mxu0
    %v1260 = vadd.f32 0.0, %v1259
    %v1261 = vpop.f32.mrf.mxu0
    %1262 = vmatprep.mubr.f32.mxu0 0.0
    %1263 = vmatmul.mubr.f32.gmra.mxu0 %v1167
    %v1264 = vpop.f32.mrf.mxu0
    %v1265 = vadd.f32 0.0, %v1264
    %v1266 = vpop.f32.mrf.mxu0
    %1267 = vmatprep.mubr.f32.mxu0 0.0
    %1268 = vmatmul.mubr.f32.gmra.mxu0 %v1170
    %v1269 = vpop.f32.mrf.mxu0
    %v1270 = vadd.f32 0.0, %v1269
    %v1271 = vpop.f32.mrf.mxu0
    %1272 = vmatprep.mubr.f32.mxu0 0.0
    %1273 = vmatmul.mubr.f32.gmra.mxu0 %v1173
    %v1274 = vpop.f32.mrf.mxu0
    %v1275 = vadd.f32 0.0, %v1274
    %v1276 = vpop.f32.mrf.mxu0
    %1277 = vmatprep.mubr.f32.mxu0 0.0
    %1278 = vmatmul.mubr.f32.gmra.mxu0 %v1176
    %v1279 = vpop.f32.mrf.mxu0
    %v1280 = vadd.f32 0.0, %v1279
    %v1281 = vpop.f32.mrf.mxu0
    %1282 = vdwg.mxu0
    %v1283 = vtanh.pop %v1245
    %v1284 = vtanh.pop %v1250
    %v1285 = vtanh.pop %v1255
    %v1286 = vtanh.pop %v1260
    %v1287 = vtanh.pop %v1265
    %v1288 = vtanh.pop %v1270
    %v1289 = vtanh.pop %v1275
    %v1290 = vtanh.pop %v1280
    %v1291 = vcombine.high %v1060, %v1060
    %v1293 = vunpack.c.l.s4 1966171168
    %v1294 = vunpack.c.0.s8 %v1293
    %v1295 = vlaneseq
    %v1296 = vshrl.u32 %v1295, 7
    %v1297 = vsub.s32 %v1294, %v1296
    %v1298 = vrot.slane %v1060, %v1297
    %v1300 = vunpack.c.l.s4 1966171168
    %v1301 = vunpack.c.0.s8 %v1300
    %v1302 = vlaneseq
    %v1303 = vshrl.u32 %v1302, 7
    %v1304 = vsub.s32 %v1301, %v1303
    %v1305 = vrot.slane %v1291, %v1304
    %v1306 = vcombine.high %v1298, %v1298
    %v1307 = vcombine.high %v1305, %v1305
    %v1309 = vunpack.c.l.s4 1966171168
    %v1310 = vunpack.c.0.s8 %v1309
    %v1311 = vlaneseq
    %v1312 = vshrl.u32 %v1311, 7
    %v1313 = vsub.s32 %v1310, %v1312
    %v1314 = vrot.slane %v1298, %v1313
    %v1316 = vunpack.c.l.s4 1966171168
    %v1317 = vunpack.c.0.s8 %v1316
    %v1318 = vlaneseq
    %v1319 = vshrl.u32 %v1318, 7
    %v1320 = vsub.s32 %v1317, %v1319
    %v1321 = vrot.slane %v1305, %v1320
    %v1323 = vunpack.c.l.s4 1966171168
    %v1324 = vunpack.c.0.s8 %v1323
    %v1325 = vlaneseq
    %v1326 = vshrl.u32 %v1325, 7
    %v1327 = vsub.s32 %v1324, %v1326
    %v1328 = vrot.slane %v1306, %v1327
    %v1330 = vunpack.c.l.s4 1966171168
    %v1331 = vunpack.c.0.s8 %v1330
    %v1332 = vlaneseq
    %v1333 = vshrl.u32 %v1332, 7
    %v1334 = vsub.s32 %v1331, %v1333
    %v1335 = vrot.slane %v1307, %v1334
    %v1336 = vcombine.high %v1314, %v1314
    %v1337 = vcombine.high %v1321, %v1321
    %v1338 = vcombine.high %v1328, %v1328
    %v1339 = vcombine.high %v1335, %v1335
    %v1340 = vlaneseq
    %v1341 = vshrl.u32 %v1340, 7
    %v1342 = vsub.s32 0, %v1341
    %v1343 = vrot.slane %v1314, %v1342
    %v1344 = vlaneseq
    %v1345 = vshrl.u32 %v1344, 7
    %v1346 = vsub.s32 0, %v1345
    %v1347 = vrot.slane %v1328, %v1346
    %v1348 = vlaneseq
    %v1349 = vshrl.u32 %v1348, 7
    %v1350 = vsub.s32 0, %v1349
    %v1351 = vrot.slane %v1336, %v1350
    %v1352 = vlaneseq
    %v1353 = vshrl.u32 %v1352, 7
    %v1354 = vsub.s32 0, %v1353
    %v1355 = vrot.slane %v1338, %v1354
    %v1356 = vlaneseq
    %v1357 = vshrl.u32 %v1356, 7
    %v1358 = vsub.s32 0, %v1357
    %v1359 = vrot.slane %v1321, %v1358
    %v1360 = vlaneseq
    %v1361 = vshrl.u32 %v1360, 7
    %v1362 = vsub.s32 0, %v1361
    %v1363 = vrot.slane %v1335, %v1362
    %v1364 = vlaneseq
    %v1365 = vshrl.u32 %v1364, 7
    %v1366 = vsub.s32 0, %v1365
    %v1367 = vrot.slane %v1337, %v1366
    %v1368 = vlaneseq
    %v1369 = vshrl.u32 %v1368, 7
    %v1370 = vsub.s32 0, %v1369
    %v1371 = vrot.slane %v1339, %v1370
    %v1380 = vmul.f32 %v1283, %v1343
    %v1381 = vmul.f32 %v1284, %v1347
    %v1382 = vmul.f32 %v1285, %v1351
    %v1383 = vmul.f32 %v1286, %v1355
    %v1384 = vmul.f32 %v1287, %v1359
    %v1385 = vmul.f32 %v1288, %v1363
    %v1386 = vmul.f32 %v1289, %v1367
    %v1387 = vmul.f32 %v1290, %v1371
    %v1388 = vsel %vm306, %v1380, 0.0
    %1389 = vadd.xlane.f32.xlu0 %v1388
    %v1390 = vpop.xlane.xlu0 %1389
    %v1391 = vsel %vm306, %v1381, 0.0
    %1392 = vadd.xlane.f32.xlu0 %v1391
    %v1393 = vpop.xlane.xlu0 %1392
    %v1394 = vsel %vm306, %v1382, 0.0
    %1395 = vadd.xlane.f32.xlu0 %v1394
    %v1396 = vpop.xlane.xlu0 %1395
    %v1397 = vsel %vm306, %v1383, 0.0
    %1398 = vadd.xlane.f32.xlu0 %v1397
    %v1399 = vpop.xlane.xlu0 %1398
    %v1400 = vsel %vm306, %v1384, 0.0
    %1401 = vadd.xlane.f32.xlu0 %v1400
    %v1402 = vpop.xlane.xlu0 %1401
    %v1403 = vsel %vm306, %v1385, 0.0
    %1404 = vadd.xlane.f32.xlu0 %v1403
    %v1405 = vpop.xlane.xlu0 %1404
    %v1406 = vsel %vm306, %v1386, 0.0
    %1407 = vadd.xlane.f32.xlu0 %v1406
    %v1408 = vpop.xlane.xlu0 %1407
    %v1409 = vsel %vm306, %v1387, 0.0
    %1410 = vadd.xlane.f32.xlu0 %v1409
    %v1411 = vpop.xlane.xlu0 %1410
    %v1412 = vmul.f32 %v1390, 1.442695
    %v1413 = vpow.pop %v1412
    %v1414 = vmul.f32 %v1393, 1.442695
    %v1415 = vpow.pop %v1414
    %v1416 = vmul.f32 %v1396, 1.442695
    %v1417 = vpow.pop %v1416
    %v1418 = vmul.f32 %v1399, 1.442695
    %v1419 = vpow.pop %v1418
    %v1420 = vmul.f32 %v1402, 1.442695
    %v1421 = vpow.pop %v1420
    %v1422 = vmul.f32 %v1405, 1.442695
    %v1423 = vpow.pop %v1422
    %v1424 = vmul.f32 %v1408, 1.442695
    %v1425 = vpow.pop %v1424
    %v1426 = vmul.f32 %v1411, 1.442695
    %v1427 = vpow.pop %v1426
    %v1436 = vlaneseq
    %v1437 = vshrl.u32 %v1436, 7
    %v1438 = vsub.s32 %v684, %v1437
    %v1439 = vrot.slane %v1413, %v1438
    %v1440 = vlaneseq
    %v1441 = vshrl.u32 %v1440, 7
    %v1442 = vsub.s32 %v684, %v1441
    %v1443 = vrot.slane %v1415, %v1442
    %v1444 = vlaneseq
    %v1445 = vshrl.u32 %v1444, 7
    %v1446 = vsub.s32 %v684, %v1445
    %v1447 = vrot.slane %v1417, %v1446
    %v1448 = vlaneseq
    %v1449 = vshrl.u32 %v1448, 7
    %v1450 = vsub.s32 %v684, %v1449
    %v1451 = vrot.slane %v1419, %v1450
    %v1452 = vlaneseq
    %v1453 = vshrl.u32 %v1452, 7
    %v1454 = vsub.s32 %v684, %v1453
    %v1455 = vrot.slane %v1421, %v1454
    %v1456 = vlaneseq
    %v1457 = vshrl.u32 %v1456, 7
    %v1458 = vsub.s32 %v684, %v1457
    %v1459 = vrot.slane %v1423, %v1458
    %v1460 = vlaneseq
    %v1461 = vshrl.u32 %v1460, 7
    %v1462 = vsub.s32 %v684, %v1461
    %v1463 = vrot.slane %v1425, %v1462
    %v1464 = vlaneseq
    %v1465 = vshrl.u32 %v1464, 7
    %v1466 = vsub.s32 %v684, %v1465
    %v1467 = vrot.slane %v1427, %v1466
    %v1468 = vsel %vm717, %v1443, %v1439
    %v1469 = vsel %vm719, %v1447, %v1468
    %v1470 = vsel %vm721, %v1451, %v1469
    %v1471 = vsel %vm723, %v1455, %v1470
    %v1472 = vsel %vm725, %v1459, %v1471
    %v1473 = vsel %vm727, %v1463, %v1472
    %v1474 = vsel %vm729, %v1467, %v1473
    %v1476 = vsel %vm675, 0.0, %v1474
    %v1477 = vlaneseq
    %v1478 = vshrl.u32 %v1477, 7
    %v1479 = vsub.s32 0, %v1478
    %v1480 = vrot.slane %v69, %v1479
    %1482 = vbcast.lane.b32.xlu0 %v1480, 256
    %v1483 = vpop.permute.xlu0 %1482
    %v1484 = vlaneseq
    %v1485 = vshrl.u32 %v1484, 7
    %v1486 = vsub.s32 1, %v1485
    %v1487 = vrot.slane %v69, %v1486
    %1489 = vbcast.lane.b32.xlu0 %v1487, 256
    %v1490 = vpop.permute.xlu0 %1489
    %v1491 = vlaneseq
    %v1492 = vshrl.u32 %v1491, 7
    %v1493 = vsub.s32 2, %v1492
    %v1494 = vrot.slane %v69, %v1493
    %1496 = vbcast.lane.b32.xlu0 %v1494, 256
    %v1497 = vpop.permute.xlu0 %1496
    %v1498 = vlaneseq
    %v1499 = vshrl.u32 %v1498, 7
    %v1500 = vsub.s32 3, %v1499
    %v1501 = vrot.slane %v69, %v1500
    %1503 = vbcast.lane.b32.xlu0 %v1501, 256
    %v1504 = vpop.permute.xlu0 %1503
    %v1505 = vlaneseq
    %v1506 = vshrl.u32 %v1505, 7
    %v1507 = vsub.s32 4, %v1506
    %v1508 = vrot.slane %v69, %v1507
    %1510 = vbcast.lane.b32.xlu0 %v1508, 256
    %v1511 = vpop.permute.xlu0 %1510
    %v1512 = vlaneseq
    %v1513 = vshrl.u32 %v1512, 7
    %v1514 = vsub.s32 5, %v1513
    %v1515 = vrot.slane %v69, %v1514
    %1517 = vbcast.lane.b32.xlu0 %v1515, 256
    %v1518 = vpop.permute.xlu0 %1517
    %v1519 = vlaneseq
    %v1520 = vshrl.u32 %v1519, 7
    %v1521 = vsub.s32 6, %v1520
    %v1522 = vrot.slane %v69, %v1521
    %1524 = vbcast.lane.b32.xlu0 %v1522, 256
    %v1525 = vpop.permute.xlu0 %1524
    %v1526 = vlaneseq
    %v1527 = vshrl.u32 %v1526, 7
    %v1528 = vsub.s32 7, %v1527
    %v1529 = vrot.slane %v69, %v1528
    %1531 = vbcast.lane.b32.xlu0 %v1529, 256
    %v1532 = vpop.permute.xlu0 %1531
    %vm1533 = vcmp.eq.s32.totalorder %v1483, %v82
    %vm1534 = vcmp.eq.s32.totalorder %v1490, %v82
    %vm1535 = vcmp.eq.s32.totalorder %v1497, %v82
    %vm1536 = vcmp.eq.s32.totalorder %v1504, %v82
    %vm1537 = vcmp.eq.s32.totalorder %v1511, %v82
    %vm1538 = vcmp.eq.s32.totalorder %v1518, %v82
    %vm1539 = vcmp.eq.s32.totalorder %v1525, %v82
    %vm1540 = vcmp.eq.s32.totalorder %v1532, %v82
    %v1541 = vlaneseq
    %v1542 = vshrl.u32 %v1541, 7
    %v1543 = vsub.s32 0, %v1542
    %v1544 = vrot.slane %v1476, %v1543
    %s1546 = sor.u32 256, 8
    %1547 = vbcast.lane.b32.xlu0 %v1544, %s1546
    %v1548 = vpop.permute.xlu0 %1547
    %v1549 = vlaneseq
    %v1550 = vshrl.u32 %v1549, 7
    %v1551 = vsub.s32 1, %v1550
    %v1552 = vrot.slane %v1476, %v1551
    %s1554 = sor.u32 256, 8
    %1555 = vbcast.lane.b32.xlu0 %v1552, %s1554
    %v1556 = vpop.permute.xlu0 %1555
    %v1557 = vlaneseq
    %v1558 = vshrl.u32 %v1557, 7
    %v1559 = vsub.s32 2, %v1558
    %v1560 = vrot.slane %v1476, %v1559
    %s1562 = sor.u32 256, 8
    %1563 = vbcast.lane.b32.xlu0 %v1560, %s1562
    %v1564 = vpop.permute.xlu0 %1563
    %v1565 = vlaneseq
    %v1566 = vshrl.u32 %v1565, 7
    %v1567 = vsub.s32 3, %v1566
    %v1568 = vrot.slane %v1476, %v1567
    %s1570 = sor.u32 256, 8
    %1571 = vbcast.lane.b32.xlu0 %v1568, %s1570
    %v1572 = vpop.permute.xlu0 %1571
    %v1573 = vlaneseq
    %v1574 = vshrl.u32 %v1573, 7
    %v1575 = vsub.s32 4, %v1574
    %v1576 = vrot.slane %v1476, %v1575
    %s1578 = sor.u32 256, 8
    %1579 = vbcast.lane.b32.xlu0 %v1576, %s1578
    %v1580 = vpop.permute.xlu0 %1579
    %v1581 = vlaneseq
    %v1582 = vshrl.u32 %v1581, 7
    %v1583 = vsub.s32 5, %v1582
    %v1584 = vrot.slane %v1476, %v1583
    %s1586 = sor.u32 256, 8
    %1587 = vbcast.lane.b32.xlu0 %v1584, %s1586
    %v1588 = vpop.permute.xlu0 %1587
    %v1589 = vlaneseq
    %v1590 = vshrl.u32 %v1589, 7
    %v1591 = vsub.s32 6, %v1590
    %v1592 = vrot.slane %v1476, %v1591
    %s1594 = sor.u32 256, 8
    %1595 = vbcast.lane.b32.xlu0 %v1592, %s1594
    %v1596 = vpop.permute.xlu0 %1595
    %v1597 = vlaneseq
    %v1598 = vshrl.u32 %v1597, 7
    %v1599 = vsub.s32 7, %v1598
    %v1600 = vrot.slane %v1476, %v1599
    %s1602 = sor.u32 256, 8
    %1603 = vbcast.lane.b32.xlu0 %v1600, %s1602
    %v1604 = vpop.permute.xlu0 %1603
    %v1605 = vsel %vm1533, %v1548, 0.0
    %v1606 = vsel %vm1534, %v1556, 0.0
    %v1607 = vsel %vm1535, %v1564, 0.0
    %v1608 = vsel %vm1536, %v1572, 0.0
    %v1609 = vsel %vm1537, %v1580, 0.0
    %v1610 = vsel %vm1538, %v1588, 0.0
    %v1611 = vsel %vm1539, %v1596, 0.0
    %v1612 = vsel %vm1540, %v1604, 0.0
    %vm1613 = vcmask 588800
    %v1614 = vsel %vm1613, %v1605, 0.0
    %v1615 = vrot.slane %v1614, 4
    %v1616 = vadd.f32 %v1614, %v1615
    %v1617 = vrot.slane %v1616, 2
    %v1618 = vadd.f32 %v1616, %v1617
    %v1619 = vrot.slane %v1618, 1
    %v1620 = vadd.f32 %v1618, %v1619
    %v1621 = vsel %vm1613, %v1606, 0.0
    %v1622 = vrot.slane %v1621, 4
    %v1623 = vadd.f32 %v1621, %v1622
    %v1624 = vrot.slane %v1623, 2
    %v1625 = vadd.f32 %v1623, %v1624
    %v1626 = vrot.slane %v1625, 1
    %v1627 = vadd.f32 %v1625, %v1626
    %v1628 = vsel %vm1613, %v1607, 0.0
    %v1629 = vrot.slane %v1628, 4
    %v1630 = vadd.f32 %v1628, %v1629
    %v1631 = vrot.slane %v1630, 2
    %v1632 = vadd.f32 %v1630, %v1631
    %v1633 = vrot.slane %v1632, 1
    %v1634 = vadd.f32 %v1632, %v1633
    %v1635 = vsel %vm1613, %v1608, 0.0
    %v1636 = vrot.slane %v1635, 4
    %v1637 = vadd.f32 %v1635, %v1636
    %v1638 = vrot.slane %v1637, 2
    %v1639 = vadd.f32 %v1637, %v1638
    %v1640 = vrot.slane %v1639, 1
    %v1641 = vadd.f32 %v1639, %v1640
    %v1642 = vsel %vm1613, %v1609, 0.0
    %v1643 = vrot.slane %v1642, 4
    %v1644 = vadd.f32 %v1642, %v1643
    %v1645 = vrot.slane %v1644, 2
    %v1646 = vadd.f32 %v1644, %v1645
    %v1647 = vrot.slane %v1646, 1
    %v1648 = vadd.f32 %v1646, %v1647
    %v1649 = vsel %vm1613, %v1610, 0.0
    %v1650 = vrot.slane %v1649, 4
    %v1651 = vadd.f32 %v1649, %v1650
    %v1652 = vrot.slane %v1651, 2
    %v1653 = vadd.f32 %v1651, %v1652
    %v1654 = vrot.slane %v1653, 1
    %v1655 = vadd.f32 %v1653, %v1654
    %v1656 = vsel %vm1613, %v1611, 0.0
    %v1657 = vrot.slane %v1656, 4
    %v1658 = vadd.f32 %v1656, %v1657
    %v1659 = vrot.slane %v1658, 2
    %v1660 = vadd.f32 %v1658, %v1659
    %v1661 = vrot.slane %v1660, 1
    %v1662 = vadd.f32 %v1660, %v1661
    %v1663 = vsel %vm1613, %v1612, 0.0
    %v1664 = vrot.slane %v1663, 4
    %v1665 = vadd.f32 %v1663, %v1664
    %v1666 = vrot.slane %v1665, 2
    %v1667 = vadd.f32 %v1665, %v1666
    %v1668 = vrot.slane %v1667, 1
    %v1669 = vadd.f32 %v1667, %v1668
    %v1678 = vsel %vm717, %v1627, %v1620
    %v1679 = vsel %vm719, %v1634, %v1678
    %v1680 = vsel %vm721, %v1641, %v1679
    %v1681 = vsel %vm723, %v1648, %v1680
    %v1682 = vsel %vm725, %v1655, %v1681
    %v1683 = vsel %vm727, %v1662, %v1682
    %v1684 = vsel %vm729, %v1669, %v1683
    %v1686 = vadd.f32 %v1145, %v1684
    %v1687 = vlog2.pop %v1686
    %v1688 = vmul.f32 %v1687, 0.6931472
    %v1689 = vsel %vm1613, %v1686, 0.0
    %1690 = vadd.xlane.f32.xlu0 %v1689
    %v1691 = vpop.xlane.xlu0 %1690
    %v1692 = vlog2.pop %v1691
    %v1693 = vmul.f32 %v1692, 0.6931472
    %v1694 = vsub.f32 %v1688, %v1693
    %1695 = vrot.lane.b32.xlu0 %v471, 32
    %v1696 = vpop.permute.xlu0 %1695
    %v1698 = vsel %vm1613, %v1694, 0.0
    %v1699 = vsel %vm306, %v1060, %v1696
    %v1700 = vsel %vm131, %v1699, 0.0
    %1701 = vst [vmem:[#allocation10] sm:$0xff] %v1698
    %1702 = vst [vmem:[#allocation10 + $0x8] sm:$0xff] %v1700
    // Predicated region
    $region34: #{tpu_custom_call.1} parent=1 // pred_check
      _
    $region35: #{tpu_custom_call.1} parent=1 // pred_check_branch
      %1704 = sbr.rel (0) target = $region37
    $region36: #{tpu_custom_call.1} parent=1 // pred_region
      %s1706 = ssub.s32 256, 256
      %1707 = vsyncadd [#allocation4], %s1706
      %s1709 = sshll.u32 [#allocation10], 4
      %s1710 = int_to_ptr.vmem [resolvable:$true] %s1709
      %1712 = dma.vmem_to_hbm [thread:$0]  %s1710, 256, %s4, [#allocation4]
    $region37: #{tpu_custom_call.1} parent=1 // pred_fallthru
      _
    // Predicated region
    $region38: #{tpu_custom_call.1} parent=1 // pred_check
      _
    $region39: #{tpu_custom_call.1} parent=1 // pred_check_branch
      %1714 = sbr.rel (0) target = $region41
    $region40: #{tpu_custom_call.1} parent=1 // pred_region
      %1715 = dma.done [#allocation4], 256
    $region41: #{tpu_custom_call.1} parent=1 // pred_fallthru
      _
    %1716 = vsyncpa [#allocation3], 1
    %1717 = vsyncpa [#allocation6], 1
    %1718 = vsyncpa [#allocation9], 1
    %1719 = vsyncpa [#allocation4], 1

</llo_original>
